<compile_context>
chip_gen: v7x
topology: tpu7x:2x2x1
jax: 0.10.0
libtpu: 0.0.40
codegen_flags: <defaults>
</compile_context>

<pallas_src>
import jax
import jax.numpy as jnp
import numpy as np
from jax.experimental import pallas as pl
from jax.experimental.pallas import tpu as pltpu


def _lstm_cell(xg, h, c, whh_t, sig_mask, H):
    """One LSTM cell step.

    `xg` already contains x @ Wih + (b_ih + b_hh), f32, shape (B, 4H).
    Gate order along the 4H axis is [i, f, o, g] (permuted host-side) so the
    single tanh gate occupies the last contiguous lane block; activations are
    two full-width EUP ops + one VPU select.
    """
    gates = xg + jnp.dot(h.astype(jnp.bfloat16), whh_t,
                         preferred_element_type=jnp.float32)
    act = jnp.where(sig_mask, jax.nn.sigmoid(gates), jnp.tanh(gates))
    i_g = act[:, 0 * H:1 * H]
    f_g = act[:, 1 * H:2 * H]
    o_g = act[:, 2 * H:3 * H]
    g_g = act[:, 3 * H:4 * H]
    c_new = f_g * c + i_g * g_g
    h_new = o_g * jnp.tanh(c_new)
    return h_new, c_new


def net_kernel(x_ref,
               wih0_ref, whh0_ref, b0_ref,
               wih1_ref, whh1_ref, b1_ref,
               wlin_ref, blin_ref,
               y_ref, hn_ref, cn_ref,
               out1_ref):
    B, T, I = x_ref.shape
    H = whh0_ref.shape[0]
    H4 = 4 * H
    O = wlin_ref.shape[1]

    # ---- Hoisted layer-0 input projection for ALL timesteps (one batched
    # MXU matmul, bias folded in) -> (B, T, 4H) f32. ----
    x2d = x_ref[...].reshape(B * T, I).astype(jnp.bfloat16)
    xg0 = (jnp.dot(x2d, wih0_ref[...], preferred_element_type=jnp.float32)
           + b0_ref[...]).reshape(B, T, H4)

    # Hoist weight/bias reads (and the bias broadcast) out of the loop.
    whh0 = whh0_ref[...]
    wih1 = wih1_ref[...]
    whh1 = whh1_ref[...]
    b1 = jnp.broadcast_to(b1_ref[...], (B, H4))

    # Lane mask: lanes < 3H -> sigmoid gates (i, f, o); lanes >= 3H -> tanh (g).
    sig_mask = jax.lax.broadcasted_iota(jnp.int32, (B, H4), 1) < 3 * H

    h0 = jnp.zeros((B, H), jnp.float32)
    c0 = jnp.zeros((B, H), jnp.float32)
    h1 = jnp.zeros((B, H), jnp.float32)
    c1 = jnp.zeros((B, H), jnp.float32)

    # Statically-unrolled recurrence.  Layer-1 step t depends only on layer-0
    # step t; using a per-step layer-1 input projection (not a batched one over
    # stacked layer-0 outputs) keeps the two layers' chains independent along
    # the wavefront so the scheduler can overlap them.
    # TODO(synk): PyTorch's inter-layer dropout is a training-mode-only op;
    # this reproduces inference forward semantics (no dropout).
    for t in range(T):
        h0, c0 = _lstm_cell(xg0[:, t, :], h0, c0, whh0, sig_mask, H)
        xg1_t = (jnp.dot(h0.astype(jnp.bfloat16), wih1,
                         preferred_element_type=jnp.float32) + b1)
        h1, c1 = _lstm_cell(xg1_t, h1, c1, whh1, sig_mask, H)
        out1_ref[:, t, :] = h1          # direct VMEM store; no jnp.stack

    # ---- Linear head over all timesteps at once: (B*T, H) @ (H, O) + b. ----
    h1_all = out1_ref[...].reshape(B * T, H).astype(jnp.bfloat16)
    y = (jnp.dot(h1_all, wlin_ref[...], preferred_element_type=jnp.float32)
         + blin_ref[...])
    y_ref[...] = y.reshape(B, T, O)

    # Final (h_n, c_n), layout (num_layers, B, H) like PyTorch.
    hn_ref[0, :, :] = h0
    hn_ref[1, :, :] = h1
    cn_ref[0, :, :] = c0
    cn_ref[1, :, :] = c1


@jax.jit
def net_forward(x, params):
    """Equivalent of Net.forward(x, hidden=None): returns (linear_out, (h_n, c_n))."""
    B, T, _ = x.shape
    H = params["whh0_t"].shape[0]
    O = params["wlin_t"].shape[1]
    L = 2  # lstm_layers

    vmem = pl.BlockSpec(memory_space=pltpu.MemorySpace.VMEM)
    args = (x,
            params["wih0_t"], params["whh0_t"], params["b0"],
            params["wih1_t"], params["whh1_t"], params["b1"],
            params["wlin_t"], params["blin"])

    y, hn, cn = pl.pallas_call(
        net_kernel,
        out_shape=(
            jax.ShapeDtypeStruct((B, T, O), jnp.float32),
            jax.ShapeDtypeStruct((L, B, H), jnp.float32),
            jax.ShapeDtypeStruct((L, B, H), jnp.float32),
        ),
        in_specs=[vmem] * len(args),
        out_specs=(vmem, vmem, vmem),
        scratch_shapes=[pltpu.VMEM((B, T, H), jnp.float32)],
    )(*args)
    return y, (hn, cn)


# ----------------------------- parameter setup -----------------------------

def init_torch_params(key, input_size, hidden_size, output_size):
    """Raw PyTorch-layout parameters, U(-1/sqrt(H), 1/sqrt(H)) init."""
    ks = jax.random.split(key, 10)
    bound = 1.0 / np.sqrt(hidden_size)

    def u(kk, shape):
        return jax.random.uniform(kk, shape, jnp.float32, -bound, bound)

    H4 = 4 * hidden_size
    return dict(
        w_ih_l0=u(ks[0], (H4, input_size)),
        w_hh_l0=u(ks[1], (H4, hidden_size)),
        b_ih_l0=u(ks[2], (H4,)),
        b_hh_l0=u(ks[3], (H4,)),
        w_ih_l1=u(ks[4], (H4, hidden_size)),
        w_hh_l1=u(ks[5], (H4, hidden_size)),
        b_ih_l1=u(ks[6], (H4,)),
        b_hh_l1=u(ks[7], (H4,)),
        w_lin=u(ks[8], (output_size, hidden_size)),
        b_lin=u(ks[9], (output_size,)),
    )


def prep_params(raw, hidden_size):
    """Kernel-ready params: gate rows permuted [i,f,g,o]->[i,f,o,g], weights
    transposed and cast to bf16, biases combined (b_ih + b_hh) in f32."""
    H = hidden_size
    perm = np.concatenate([np.arange(0, H), np.arange(H, 2 * H),
                           np.arange(3 * H, 4 * H), np.arange(2 * H, 3 * H)])

    def gate_w_t(w):            # (4H, in) -> (in, 4H) bf16, columns [i|f|o|g]
        return jnp.asarray(w)[perm, :].T.astype(jnp.bfloat16)

    def gate_b(bi, bh):         # combined bias, (1, 4H) f32, permuted
        return (jnp.asarray(bi) + jnp.asarray(bh))[perm][None, :].astype(jnp.float32)

    return dict(
        wih0_t=gate_w_t(raw["w_ih_l0"]), whh0_t=gate_w_t(raw["w_hh_l0"]),
        b0=gate_b(raw["b_ih_l0"], raw["b_hh_l0"]),
        wih1_t=gate_w_t(raw["w_ih_l1"]), whh1_t=gate_w_t(raw["w_hh_l1"]),
        b1=gate_b(raw["b_ih_l1"], raw["b_hh_l1"]),
        wlin_t=jnp.asarray(raw["w_lin"]).T.astype(jnp.bfloat16),
        blin=jnp.asarray(raw["b_lin"])[None, :].astype(jnp.float32),
    )


# ------------------------- pure-JAX f32 reference --------------------------

def net_reference(x, raw, hidden_size):
    H = hidden_size

    def lstm_layer(inp, wih, whh, bih, bhh):
        B, T, _ = inp.shape
        h = jnp.zeros((B, H), jnp.float32)
        c = jnp.zeros((B, H), jnp.float32)
        outs = []
        for t in range(T):
            gates = inp[:, t, :] @ wih.T + h @ whh.T + bih + bhh
            i = jax.nn.sigmoid(gates[:, 0:H])
            f = jax.nn.sigmoid(gates[:, H:2 * H])
            g = jnp.tanh(gates[:, 2 * H:3 * H])
            o = jax.nn.sigmoid(gates[:, 3 * H:4 * H])
            c = f * c + i * g
            h = o * jnp.tanh(c)
            outs.append(h)
        return jnp.stack(outs, axis=1), h, c

    out0, h0, c0 = lstm_layer(x, raw["w_ih_l0"], raw["w_hh_l0"],
                              raw["b_ih_l0"], raw["b_hh_l0"])
    out1, h1, c1 = lstm_layer(out0, raw["w_ih_l1"], raw["w_hh_l1"],
                              raw["b_ih_l1"], raw["b_hh_l1"])
    y = out1 @ raw["w_lin"].T + raw["b_lin"]
    return y, (jnp.stack([h0, h1], 0), jnp.stack([c0, c1], 0))


if __name__ == "__main__":
    # config: input_size=8, hidden_size=32, lstm_layers=2, output_size=4
    B, T, I, H, O = 2, 8, 8, 32, 4
    key = jax.random.PRNGKey(0)
    kx, kp = jax.random.split(key)

    x = jax.random.normal(kx, (B, T, I), dtype=jnp.float32)
    raw = init_torch_params(kp, I, H, O)
    params = prep_params(raw, H)

    y, (hn, cn) = net_forward(x, params)
    jax.block_until_ready((y, hn, cn))

    assert y.shape == (B, T, O)
    assert hn.shape == (2, B, H) and cn.shape == (2, B, H)

    # Numerical sanity check vs pure-JAX f32 reference (kernel matmuls run in
    # bf16 with f32 accumulation -> loose tolerance).
    y_r, (hn_r, cn_r) = net_reference(x, raw, H)
    np.testing.assert_allclose(np.asarray(y), np.asarray(y_r), atol=5e-2, rtol=5e-2)
    np.testing.assert_allclose(np.asarray(hn), np.asarray(hn_r), atol=5e-2, rtol=5e-2)
    np.testing.assert_allclose(np.asarray(cn), np.asarray(cn_r), atol=5e-2, rtol=5e-2)

    print("KERNEL_OK")
</pallas_src>

<mosaic_0001>
module attributes {stable_mosaic.version = 11 : i64} {
  func.func @net_kernel(%arg0: memref<2x8x8xf32, #tpu.memory_space<vmem>>, %arg1: memref<8x128xbf16, #tpu.memory_space<vmem>>, %arg2: memref<32x128xbf16, #tpu.memory_space<vmem>>, %arg3: memref<1x128xf32, #tpu.memory_space<vmem>>, %arg4: memref<32x128xbf16, #tpu.memory_space<vmem>>, %arg5: memref<32x128xbf16, #tpu.memory_space<vmem>>, %arg6: memref<1x128xf32, #tpu.memory_space<vmem>>, %arg7: memref<32x4xbf16, #tpu.memory_space<vmem>>, %arg8: memref<1x4xf32, #tpu.memory_space<vmem>>, %arg9: memref<2x8x4xf32, #tpu.memory_space<vmem>>, %arg10: memref<2x2x32xf32, #tpu.memory_space<vmem>>, %arg11: memref<2x2x32xf32, #tpu.memory_space<vmem>>, %arg12: memref<2x8x32xf32, #tpu.memory_space<vmem>>) attributes {dimension_semantics = [], scalar_prefetch = 0 : i64, scratch_operands = 1 : i64, tpu.core_type = #tpu.core_type<tc>} {
    %c0 = arith.constant 0 : index
    %c0_0 = arith.constant 0 : index
    %c0_1 = arith.constant 0 : index
    %0 = vector.load %arg0[%c0, %c0_0, %c0_1] : memref<2x8x8xf32, #tpu.memory_space<vmem>>, vector<2x8x8xf32>
    %1 = vector.shape_cast %0 : vector<2x8x8xf32> to vector<16x8xf32>
    %2 = arith.truncf %1 : vector<16x8xf32> to vector<16x8xbf16>
    %c0_2 = arith.constant 0 : index
    %c0_3 = arith.constant 0 : index
    %3 = vector.load %arg1[%c0_2, %c0_3] : memref<8x128xbf16, #tpu.memory_space<vmem>>, vector<8x128xbf16>
    %cst = arith.constant dense<0.000000e+00> : vector<16x128xf32>
    %4 = tpu.matmul %2, %3, %cst {dimension_numbers = #tpu.dot_dimension_numbers<[1], [0], [0], [1], [0, 0, 1, 1], [], []>} : vector<16x8xbf16>, vector<8x128xbf16>, vector<16x128xf32> -> vector<16x128xf32>
    %c0_4 = arith.constant 0 : index
    %c0_5 = arith.constant 0 : index
    %5 = vector.load %arg3[%c0_4, %c0_5] : memref<1x128xf32, #tpu.memory_space<vmem>>, vector<1x128xf32>
    %6 = vector.broadcast %5 : vector<1x128xf32> to vector<16x128xf32>
    %7 = arith.addf %4, %6 : vector<16x128xf32>
    %8 = vector.shape_cast %7 : vector<16x128xf32> to vector<2x8x128xf32>
    %c0_6 = arith.constant 0 : index
    %c0_7 = arith.constant 0 : index
    %9 = vector.load %arg2[%c0_6, %c0_7] : memref<32x128xbf16, #tpu.memory_space<vmem>>, vector<32x128xbf16>
    %c0_8 = arith.constant 0 : index
    %c0_9 = arith.constant 0 : index
    %10 = vector.load %arg4[%c0_8, %c0_9] : memref<32x128xbf16, #tpu.memory_space<vmem>>, vector<32x128xbf16>
    %c0_10 = arith.constant 0 : index
    %c0_11 = arith.constant 0 : index
    %11 = vector.load %arg5[%c0_10, %c0_11] : memref<32x128xbf16, #tpu.memory_space<vmem>>, vector<32x128xbf16>
    %c0_12 = arith.constant 0 : index
    %c0_13 = arith.constant 0 : index
    %12 = vector.load %arg6[%c0_12, %c0_13] : memref<1x128xf32, #tpu.memory_space<vmem>>, vector<1x128xf32>
    %13 = vector.shape_cast %12 : vector<1x128xf32> to vector<1x128xf32>
    %14 = vector.broadcast %13 : vector<1x128xf32> to vector<2x128xf32>
    %15 = tpu.iota {dimensions = array<i32: 1>} : vector<2x128xi32>
    %c96_i32 = arith.constant 96 : i32
    %16 = vector.broadcast %c96_i32 : i32 to vector<2x128xi32>
    %17 = arith.cmpi slt, %15, %16 : vector<2x128xi32>
    %cst_14 = arith.constant 0.000000e+00 : f32
    %18 = vector.broadcast %cst_14 : f32 to vector<2x32xf32>
    %cst_15 = arith.constant 0.000000e+00 : f32
    %19 = vector.broadcast %cst_15 : f32 to vector<2x32xf32>
    %cst_16 = arith.constant 0.000000e+00 : f32
    %20 = vector.broadcast %cst_16 : f32 to vector<2x32xf32>
    %cst_17 = arith.constant 0.000000e+00 : f32
    %21 = vector.broadcast %cst_17 : f32 to vector<2x32xf32>
    %22 = vector.extract_strided_slice %8 {offsets = [0, 0, 0], sizes = [2, 1, 128], strides = [1, 1, 1]} : vector<2x8x128xf32> to vector<2x1x128xf32>
    %23 = vector.shape_cast %22 : vector<2x1x128xf32> to vector<2x128xf32>
    %24 = arith.truncf %18 : vector<2x32xf32> to vector<2x32xbf16>
    %cst_18 = arith.constant dense<0.000000e+00> : vector<2x128xf32>
    %25 = tpu.matmul %24, %9, %cst_18 {dimension_numbers = #tpu.dot_dimension_numbers<[1], [0], [0], [1], [0, 0, 1, 1], [], []>} : vector<2x32xbf16>, vector<32x128xbf16>, vector<2x128xf32> -> vector<2x128xf32>
    %26 = arith.addf %23, %25 : vector<2x128xf32>
    %27 = arith.negf %26 : vector<2x128xf32>
    %28 = math.exp %27 : vector<2x128xf32>
    %cst_19 = arith.constant 1.000000e+00 : f32
    %29 = vector.broadcast %cst_19 : f32 to vector<2x128xf32>
    %30 = arith.addf %29, %28 : vector<2x128xf32>
    %31 = arith.divf %29, %30 : vector<2x128xf32>
    %32 = math.tanh %26 : vector<2x128xf32>
    %33 = arith.select %17, %31, %32 : vector<2x128xi1>, vector<2x128xf32>
    %34 = vector.extract_strided_slice %33 {offsets = [0, 0], sizes = [2, 32], strides = [1, 1]} : vector<2x128xf32> to vector<2x32xf32>
    %35 = vector.extract_strided_slice %33 {offsets = [0, 32], sizes = [2, 32], strides = [1, 1]} : vector<2x128xf32> to vector<2x32xf32>
    %36 = vector.extract_strided_slice %33 {offsets = [0, 64], sizes = [2, 32], strides = [1, 1]} : vector<2x128xf32> to vector<2x32xf32>
    %37 = vector.extract_strided_slice %33 {offsets = [0, 96], sizes = [2, 32], strides = [1, 1]} : vector<2x128xf32> to vector<2x32xf32>
    %38 = arith.mulf %35, %19 : vector<2x32xf32>
    %39 = arith.mulf %34, %37 : vector<2x32xf32>
    %40 = arith.addf %38, %39 : vector<2x32xf32>
    %41 = math.tanh %40 : vector<2x32xf32>
    %42 = arith.mulf %36, %41 : vector<2x32xf32>
    %43 = arith.truncf %42 : vector<2x32xf32> to vector<2x32xbf16>
    %cst_20 = arith.constant dense<0.000000e+00> : vector<2x128xf32>
    %44 = tpu.matmul %43, %10, %cst_20 {dimension_numbers = #tpu.dot_dimension_numbers<[1], [0], [0], [1], [0, 0, 1, 1], [], []>} : vector<2x32xbf16>, vector<32x128xbf16>, vector<2x128xf32> -> vector<2x128xf32>
    %45 = arith.addf %44, %14 : vector<2x128xf32>
    %46 = arith.truncf %20 : vector<2x32xf32> to vector<2x32xbf16>
    %cst_21 = arith.constant dense<0.000000e+00> : vector<2x128xf32>
    %47 = tpu.matmul %46, %11, %cst_21 {dimension_numbers = #tpu.dot_dimension_numbers<[1], [0], [0], [1], [0, 0, 1, 1], [], []>} : vector<2x32xbf16>, vector<32x128xbf16>, vector<2x128xf32> -> vector<2x128xf32>
    %48 = arith.addf %45, %47 : vector<2x128xf32>
    %49 = arith.negf %48 : vector<2x128xf32>
    %50 = math.exp %49 : vector<2x128xf32>
    %cst_22 = arith.constant 1.000000e+00 : f32
    %51 = vector.broadcast %cst_22 : f32 to vector<2x128xf32>
    %52 = arith.addf %51, %50 : vector<2x128xf32>
    %53 = arith.divf %51, %52 : vector<2x128xf32>
    %54 = math.tanh %48 : vector<2x128xf32>
    %55 = arith.select %17, %53, %54 : vector<2x128xi1>, vector<2x128xf32>
    %56 = vector.extract_strided_slice %55 {offsets = [0, 0], sizes = [2, 32], strides = [1, 1]} : vector<2x128xf32> to vector<2x32xf32>
    %57 = vector.extract_strided_slice %55 {offsets = [0, 32], sizes = [2, 32], strides = [1, 1]} : vector<2x128xf32> to vector<2x32xf32>
    %58 = vector.extract_strided_slice %55 {offsets = [0, 64], sizes = [2, 32], strides = [1, 1]} : vector<2x128xf32> to vector<2x32xf32>
    %59 = vector.extract_strided_slice %55 {offsets = [0, 96], sizes = [2, 32], strides = [1, 1]} : vector<2x128xf32> to vector<2x32xf32>
    %60 = arith.mulf %57, %21 : vector<2x32xf32>
    %61 = arith.mulf %56, %59 : vector<2x32xf32>
    %62 = arith.addf %60, %61 : vector<2x32xf32>
    %63 = math.tanh %62 : vector<2x32xf32>
    %64 = arith.mulf %58, %63 : vector<2x32xf32>
    %c0_23 = arith.constant 0 : index
    %c0_24 = arith.constant 0 : index
    %c0_25 = arith.constant 0 : index
    %65 = vector.load %arg12[%c0_23, %c0_24, %c0_25] : memref<2x8x32xf32, #tpu.memory_space<vmem>>, vector<2x1x32xf32>
    %66 = vector.shape_cast %65 : vector<2x1x32xf32> to vector<2x32xf32>
    %67 = vector.shape_cast %64 : vector<2x32xf32> to vector<2x1x32xf32>
    tpu.vector_store %arg12[%c0_23, %c0_24, %c0_25], %67 {strides = array<i32>} : memref<2x8x32xf32, #tpu.memory_space<vmem>>, vector<2x1x32xf32>,
    %68 = vector.extract_strided_slice %8 {offsets = [0, 1, 0], sizes = [2, 1, 128], strides = [1, 1, 1]} : vector<2x8x128xf32> to vector<2x1x128xf32>
    %69 = vector.shape_cast %68 : vector<2x1x128xf32> to vector<2x128xf32>
    %70 = arith.truncf %42 : vector<2x32xf32> to vector<2x32xbf16>
    %cst_26 = arith.constant dense<0.000000e+00> : vector<2x128xf32>
    %71 = tpu.matmul %70, %9, %cst_26 {dimension_numbers = #tpu.dot_dimension_numbers<[1], [0], [0], [1], [0, 0, 1, 1], [], []>} : vector<2x32xbf16>, vector<32x128xbf16>, vector<2x128xf32> -> vector<2x128xf32>
    %72 = arith.addf %69, %71 : vector<2x128xf32>
    %73 = arith.negf %72 : vector<2x128xf32>
    %74 = math.exp %73 : vector<2x128xf32>
    %cst_27 = arith.constant 1.000000e+00 : f32
    %75 = vector.broadcast %cst_27 : f32 to vector<2x128xf32>
    %76 = arith.addf %75, %74 : vector<2x128xf32>
    %77 = arith.divf %75, %76 : vector<2x128xf32>
    %78 = math.tanh %72 : vector<2x128xf32>
    %79 = arith.select %17, %77, %78 : vector<2x128xi1>, vector<2x128xf32>
    %80 = vector.extract_strided_slice %79 {offsets = [0, 0], sizes = [2, 32], strides = [1, 1]} : vector<2x128xf32> to vector<2x32xf32>
    %81 = vector.extract_strided_slice %79 {offsets = [0, 32], sizes = [2, 32], strides = [1, 1]} : vector<2x128xf32> to vector<2x32xf32>
    %82 = vector.extract_strided_slice %79 {offsets = [0, 64], sizes = [2, 32], strides = [1, 1]} : vector<2x128xf32> to vector<2x32xf32>
    %83 = vector.extract_strided_slice %79 {offsets = [0, 96], sizes = [2, 32], strides = [1, 1]} : vector<2x128xf32> to vector<2x32xf32>
    %84 = arith.mulf %81, %40 : vector<2x32xf32>
    %85 = arith.mulf %80, %83 : vector<2x32xf32>
    %86 = arith.addf %84, %85 : vector<2x32xf32>
    %87 = math.tanh %86 : vector<2x32xf32>
    %88 = arith.mulf %82, %87 : vector<2x32xf32>
    %89 = arith.truncf %88 : vector<2x32xf32> to vector<2x32xbf16>
    %cst_28 = arith.constant dense<0.000000e+00> : vector<2x128xf32>
    %90 = tpu.matmul %89, %10, %cst_28 {dimension_numbers = #tpu.dot_dimension_numbers<[1], [0], [0], [1], [0, 0, 1, 1], [], []>} : vector<2x32xbf16>, vector<32x128xbf16>, vector<2x128xf32> -> vector<2x128xf32>
    %91 = arith.addf %90, %14 : vector<2x128xf32>
    %92 = arith.truncf %64 : vector<2x32xf32> to vector<2x32xbf16>
    %cst_29 = arith.constant dense<0.000000e+00> : vector<2x128xf32>
    %93 = tpu.matmul %92, %11, %cst_29 {dimension_numbers = #tpu.dot_dimension_numbers<[1], [0], [0], [1], [0, 0, 1, 1], [], []>} : vector<2x32xbf16>, vector<32x128xbf16>, vector<2x128xf32> -> vector<2x128xf32>
    %94 = arith.addf %91, %93 : vector<2x128xf32>
    %95 = arith.negf %94 : vector<2x128xf32>
    %96 = math.exp %95 : vector<2x128xf32>
    %cst_30 = arith.constant 1.000000e+00 : f32
    %97 = vector.broadcast %cst_30 : f32 to vector<2x128xf32>
    %98 = arith.addf %97, %96 : vector<2x128xf32>
    %99 = arith.divf %97, %98 : vector<2x128xf32>
    %100 = math.tanh %94 : vector<2x128xf32>
    %101 = arith.select %17, %99, %100 : vector<2x128xi1>, vector<2x128xf32>
    %102 = vector.extract_strided_slice %101 {offsets = [0, 0], sizes = [2, 32], strides = [1, 1]} : vector<2x128xf32> to vector<2x32xf32>
    %103 = vector.extract_strided_slice %101 {offsets = [0, 32], sizes = [2, 32], strides = [1, 1]} : vector<2x128xf32> to vector<2x32xf32>
    %104 = vector.extract_strided_slice %101 {offsets = [0, 64], sizes = [2, 32], strides = [1, 1]} : vector<2x128xf32> to vector<2x32xf32>
    %105 = vector.extract_strided_slice %101 {offsets = [0, 96], sizes = [2, 32], strides = [1, 1]} : vector<2x128xf32> to vector<2x32xf32>
    %106 = arith.mulf %103, %62 : vector<2x32xf32>
    %107 = arith.mulf %102, %105 : vector<2x32xf32>
    %108 = arith.addf %106, %107 : vector<2x32xf32>
    %109 = math.tanh %108 : vector<2x32xf32>
    %110 = arith.mulf %104, %109 : vector<2x32xf32>
    %c0_31 = arith.constant 0 : index
    %c1 = arith.constant 1 : index
    %c0_32 = arith.constant 0 : index
    %111 = vector.load %arg12[%c0_31, %c1, %c0_32] : memref<2x8x32xf32, #tpu.memory_space<vmem>>, vector<2x1x32xf32>
    %112 = vector.shape_cast %111 : vector<2x1x32xf32> to vector<2x32xf32>
    %113 = vector.shape_cast %110 : vector<2x32xf32> to vector<2x1x32xf32>
    tpu.vector_store %arg12[%c0_31, %c1, %c0_32], %113 {strides = array<i32>} : memref<2x8x32xf32, #tpu.memory_space<vmem>>, vector<2x1x32xf32>,
    %114 = vector.extract_strided_slice %8 {offsets = [0, 2, 0], sizes = [2, 1, 128], strides = [1, 1, 1]} : vector<2x8x128xf32> to vector<2x1x128xf32>
    %115 = vector.shape_cast %114 : vector<2x1x128xf32> to vector<2x128xf32>
    %116 = arith.truncf %88 : vector<2x32xf32> to vector<2x32xbf16>
    %cst_33 = arith.constant dense<0.000000e+00> : vector<2x128xf32>
    %117 = tpu.matmul %116, %9, %cst_33 {dimension_numbers = #tpu.dot_dimension_numbers<[1], [0], [0], [1], [0, 0, 1, 1], [], []>} : vector<2x32xbf16>, vector<32x128xbf16>, vector<2x128xf32> -> vector<2x128xf32>
    %118 = arith.addf %115, %117 : vector<2x128xf32>
    %119 = arith.negf %118 : vector<2x128xf32>
    %120 = math.exp %119 : vector<2x128xf32>
    %cst_34 = arith.constant 1.000000e+00 : f32
    %121 = vector.broadcast %cst_34 : f32 to vector<2x128xf32>
    %122 = arith.addf %121, %120 : vector<2x128xf32>
    %123 = arith.divf %121, %122 : vector<2x128xf32>
    %124 = math.tanh %118 : vector<2x128xf32>
    %125 = arith.select %17, %123, %124 : vector<2x128xi1>, vector<2x128xf32>
    %126 = vector.extract_strided_slice %125 {offsets = [0, 0], sizes = [2, 32], strides = [1, 1]} : vector<2x128xf32> to vector<2x32xf32>
    %127 = vector.extract_strided_slice %125 {offsets = [0, 32], sizes = [2, 32], strides = [1, 1]} : vector<2x128xf32> to vector<2x32xf32>
    %128 = vector.extract_strided_slice %125 {offsets = [0, 64], sizes = [2, 32], strides = [1, 1]} : vector<2x128xf32> to vector<2x32xf32>
    %129 = vector.extract_strided_slice %125 {offsets = [0, 96], sizes = [2, 32], strides = [1, 1]} : vector<2x128xf32> to vector<2x32xf32>
    %130 = arith.mulf %127, %86 : vector<2x32xf32>
    %131 = arith.mulf %126, %129 : vector<2x32xf32>
    %132 = arith.addf %130, %131 : vector<2x32xf32>
    %133 = math.tanh %132 : vector<2x32xf32>
    %134 = arith.mulf %128, %133 : vector<2x32xf32>
    %135 = arith.truncf %134 : vector<2x32xf32> to vector<2x32xbf16>
    %cst_35 = arith.constant dense<0.000000e+00> : vector<2x128xf32>
    %136 = tpu.matmul %135, %10, %cst_35 {dimension_numbers = #tpu.dot_dimension_numbers<[1], [0], [0], [1], [0, 0, 1, 1], [], []>} : vector<2x32xbf16>, vector<32x128xbf16>, vector<2x128xf32> -> vector<2x128xf32>
    %137 = arith.addf %136, %14 : vector<2x128xf32>
    %138 = arith.truncf %110 : vector<2x32xf32> to vector<2x32xbf16>
    %cst_36 = arith.constant dense<0.000000e+00> : vector<2x128xf32>
    %139 = tpu.matmul %138, %11, %cst_36 {dimension_numbers = #tpu.dot_dimension_numbers<[1], [0], [0], [1], [0, 0, 1, 1], [], []>} : vector<2x32xbf16>, vector<32x128xbf16>, vector<2x128xf32> -> vector<2x128xf32>
    %140 = arith.addf %137, %139 : vector<2x128xf32>
    %141 = arith.negf %140 : vector<2x128xf32>
    %142 = math.exp %141 : vector<2x128xf32>
    %cst_37 = arith.constant 1.000000e+00 : f32
    %143 = vector.broadcast %cst_37 : f32 to vector<2x128xf32>
    %144 = arith.addf %143, %142 : vector<2x128xf32>
    %145 = arith.divf %143, %144 : vector<2x128xf32>
    %146 = math.tanh %140 : vector<2x128xf32>
    %147 = arith.select %17, %145, %146 : vector<2x128xi1>, vector<2x128xf32>
    %148 = vector.extract_strided_slice %147 {offsets = [0, 0], sizes = [2, 32], strides = [1, 1]} : vector<2x128xf32> to vector<2x32xf32>
    %149 = vector.extract_strided_slice %147 {offsets = [0, 32], sizes = [2, 32], strides = [1, 1]} : vector<2x128xf32> to vector<2x32xf32>
    %150 = vector.extract_strided_slice %147 {offsets = [0, 64], sizes = [2, 32], strides = [1, 1]} : vector<2x128xf32> to vector<2x32xf32>
    %151 = vector.extract_strided_slice %147 {offsets = [0, 96], sizes = [2, 32], strides = [1, 1]} : vector<2x128xf32> to vector<2x32xf32>
    %152 = arith.mulf %149, %108 : vector<2x32xf32>
    %153 = arith.mulf %148, %151 : vector<2x32xf32>
    %154 = arith.addf %152, %153 : vector<2x32xf32>
    %155 = math.tanh %154 : vector<2x32xf32>
    %156 = arith.mulf %150, %155 : vector<2x32xf32>
    %c0_38 = arith.constant 0 : index
    %c2 = arith.constant 2 : index
    %c0_39 = arith.constant 0 : index
    %157 = vector.load %arg12[%c0_38, %c2, %c0_39] : memref<2x8x32xf32, #tpu.memory_space<vmem>>, vector<2x1x32xf32>
    %158 = vector.shape_cast %157 : vector<2x1x32xf32> to vector<2x32xf32>
    %159 = vector.shape_cast %156 : vector<2x32xf32> to vector<2x1x32xf32>
    tpu.vector_store %arg12[%c0_38, %c2, %c0_39], %159 {strides = array<i32>} : memref<2x8x32xf32, #tpu.memory_space<vmem>>, vector<2x1x32xf32>,
    %160 = vector.extract_strided_slice %8 {offsets = [0, 3, 0], sizes = [2, 1, 128], strides = [1, 1, 1]} : vector<2x8x128xf32> to vector<2x1x128xf32>
    %161 = vector.shape_cast %160 : vector<2x1x128xf32> to vector<2x128xf32>
    %162 = arith.truncf %134 : vector<2x32xf32> to vector<2x32xbf16>
    %cst_40 = arith.constant dense<0.000000e+00> : vector<2x128xf32>
    %163 = tpu.matmul %162, %9, %cst_40 {dimension_numbers = #tpu.dot_dimension_numbers<[1], [0], [0], [1], [0, 0, 1, 1], [], []>} : vector<2x32xbf16>, vector<32x128xbf16>, vector<2x128xf32> -> vector<2x128xf32>
    %164 = arith.addf %161, %163 : vector<2x128xf32>
    %165 = arith.negf %164 : vector<2x128xf32>
    %166 = math.exp %165 : vector<2x128xf32>
    %cst_41 = arith.constant 1.000000e+00 : f32
    %167 = vector.broadcast %cst_41 : f32 to vector<2x128xf32>
    %168 = arith.addf %167, %166 : vector<2x128xf32>
    %169 = arith.divf %167, %168 : vector<2x128xf32>
    %170 = math.tanh %164 : vector<2x128xf32>
    %171 = arith.select %17, %169, %170 : vector<2x128xi1>, vector<2x128xf32>
    %172 = vector.extract_strided_slice %171 {offsets = [0, 0], sizes = [2, 32], strides = [1, 1]} : vector<2x128xf32> to vector<2x32xf32>
    %173 = vector.extract_strided_slice %171 {offsets = [0, 32], sizes = [2, 32], strides = [1, 1]} : vector<2x128xf32> to vector<2x32xf32>
    %174 = vector.extract_strided_slice %171 {offsets = [0, 64], sizes = [2, 32], strides = [1, 1]} : vector<2x128xf32> to vector<2x32xf32>
    %175 = vector.extract_strided_slice %171 {offsets = [0, 96], sizes = [2, 32], strides = [1, 1]} : vector<2x128xf32> to vector<2x32xf32>
    %176 = arith.mulf %173, %132 : vector<2x32xf32>
    %177 = arith.mulf %172, %175 : vector<2x32xf32>
    %178 = arith.addf %176, %177 : vector<2x32xf32>
    %179 = math.tanh %178 : vector<2x32xf32>
    %180 = arith.mulf %174, %179 : vector<2x32xf32>
    %181 = arith.truncf %180 : vector<2x32xf32> to vector<2x32xbf16>
    %cst_42 = arith.constant dense<0.000000e+00> : vector<2x128xf32>
    %182 = tpu.matmul %181, %10, %cst_42 {dimension_numbers = #tpu.dot_dimension_numbers<[1], [0], [0], [1], [0, 0, 1, 1], [], []>} : vector<2x32xbf16>, vector<32x128xbf16>, vector<2x128xf32> -> vector<2x128xf32>
    %183 = arith.addf %182, %14 : vector<2x128xf32>
    %184 = arith.truncf %156 : vector<2x32xf32> to vector<2x32xbf16>
    %cst_43 = arith.constant dense<0.000000e+00> : vector<2x128xf32>
    %185 = tpu.matmul %184, %11, %cst_43 {dimension_numbers = #tpu.dot_dimension_numbers<[1], [0], [0], [1], [0, 0, 1, 1], [], []>} : vector<2x32xbf16>, vector<32x128xbf16>, vector<2x128xf32> -> vector<2x128xf32>
    %186 = arith.addf %183, %185 : vector<2x128xf32>
    %187 = arith.negf %186 : vector<2x128xf32>
    %188 = math.exp %187 : vector<2x128xf32>
    %cst_44 = arith.constant 1.000000e+00 : f32
    %189 = vector.broadcast %cst_44 : f32 to vector<2x128xf32>
    %190 = arith.addf %189, %188 : vector<2x128xf32>
    %191 = arith.divf %189, %190 : vector<2x128xf32>
    %192 = math.tanh %186 : vector<2x128xf32>
    %193 = arith.select %17, %191, %192 : vector<2x128xi1>, vector<2x128xf32>
    %194 = vector.extract_strided_slice %193 {offsets = [0, 0], sizes = [2, 32], strides = [1, 1]} : vector<2x128xf32> to vector<2x32xf32>
    %195 = vector.extract_strided_slice %193 {offsets = [0, 32], sizes = [2, 32], strides = [1, 1]} : vector<2x128xf32> to vector<2x32xf32>
    %196 = vector.extract_strided_slice %193 {offsets = [0, 64], sizes = [2, 32], strides = [1, 1]} : vector<2x128xf32> to vector<2x32xf32>
    %197 = vector.extract_strided_slice %193 {offsets = [0, 96], sizes = [2, 32], strides = [1, 1]} : vector<2x128xf32> to vector<2x32xf32>
    %198 = arith.mulf %195, %154 : vector<2x32xf32>
    %199 = arith.mulf %194, %197 : vector<2x32xf32>
    %200 = arith.addf %198, %199 : vector<2x32xf32>
    %201 = math.tanh %200 : vector<2x32xf32>
    %202 = arith.mulf %196, %201 : vector<2x32xf32>
    %c0_45 = arith.constant 0 : index
    %c3 = arith.constant 3 : index
    %c0_46 = arith.constant 0 : index
    %203 = vector.load %arg12[%c0_45, %c3, %c0_46] : memref<2x8x32xf32, #tpu.memory_space<vmem>>, vector<2x1x32xf32>
    %204 = vector.shape_cast %203 : vector<2x1x32xf32> to vector<2x32xf32>
    %205 = vector.shape_cast %202 : vector<2x32xf32> to vector<2x1x32xf32>
    tpu.vector_store %arg12[%c0_45, %c3, %c0_46], %205 {strides = array<i32>} : memref<2x8x32xf32, #tpu.memory_space<vmem>>, vector<2x1x32xf32>,
    %206 = vector.extract_strided_slice %8 {offsets = [0, 4, 0], sizes = [2, 1, 128], strides = [1, 1, 1]} : vector<2x8x128xf32> to vector<2x1x128xf32>
    %207 = vector.shape_cast %206 : vector<2x1x128xf32> to vector<2x128xf32>
    %208 = arith.truncf %180 : vector<2x32xf32> to vector<2x32xbf16>
    %cst_47 = arith.constant dense<0.000000e+00> : vector<2x128xf32>
    %209 = tpu.matmul %208, %9, %cst_47 {dimension_numbers = #tpu.dot_dimension_numbers<[1], [0], [0], [1], [0, 0, 1, 1], [], []>} : vector<2x32xbf16>, vector<32x128xbf16>, vector<2x128xf32> -> vector<2x128xf32>
    %210 = arith.addf %207, %209 : vector<2x128xf32>
    %211 = arith.negf %210 : vector<2x128xf32>
    %212 = math.exp %211 : vector<2x128xf32>
    %cst_48 = arith.constant 1.000000e+00 : f32
    %213 = vector.broadcast %cst_48 : f32 to vector<2x128xf32>
    %214 = arith.addf %213, %212 : vector<2x128xf32>
    %215 = arith.divf %213, %214 : vector<2x128xf32>
    %216 = math.tanh %210 : vector<2x128xf32>
    %217 = arith.select %17, %215, %216 : vector<2x128xi1>, vector<2x128xf32>
    %218 = vector.extract_strided_slice %217 {offsets = [0, 0], sizes = [2, 32], strides = [1, 1]} : vector<2x128xf32> to vector<2x32xf32>
    %219 = vector.extract_strided_slice %217 {offsets = [0, 32], sizes = [2, 32], strides = [1, 1]} : vector<2x128xf32> to vector<2x32xf32>
    %220 = vector.extract_strided_slice %217 {offsets = [0, 64], sizes = [2, 32], strides = [1, 1]} : vector<2x128xf32> to vector<2x32xf32>
    %221 = vector.extract_strided_slice %217 {offsets = [0, 96], sizes = [2, 32], strides = [1, 1]} : vector<2x128xf32> to vector<2x32xf32>
    %222 = arith.mulf %219, %178 : vector<2x32xf32>
    %223 = arith.mulf %218, %221 : vector<2x32xf32>
    %224 = arith.addf %222, %223 : vector<2x32xf32>
    %225 = math.tanh %224 : vector<2x32xf32>
    %226 = arith.mulf %220, %225 : vector<2x32xf32>
    %227 = arith.truncf %226 : vector<2x32xf32> to vector<2x32xbf16>
    %cst_49 = arith.constant dense<0.000000e+00> : vector<2x128xf32>
    %228 = tpu.matmul %227, %10, %cst_49 {dimension_numbers = #tpu.dot_dimension_numbers<[1], [0], [0], [1], [0, 0, 1, 1], [], []>} : vector<2x32xbf16>, vector<32x128xbf16>, vector<2x128xf32> -> vector<2x128xf32>
    %229 = arith.addf %228, %14 : vector<2x128xf32>
    %230 = arith.truncf %202 : vector<2x32xf32> to vector<2x32xbf16>
    %cst_50 = arith.constant dense<0.000000e+00> : vector<2x128xf32>
    %231 = tpu.matmul %230, %11, %cst_50 {dimension_numbers = #tpu.dot_dimension_numbers<[1], [0], [0], [1], [0, 0, 1, 1], [], []>} : vector<2x32xbf16>, vector<32x128xbf16>, vector<2x128xf32> -> vector<2x128xf32>
    %232 = arith.addf %229, %231 : vector<2x128xf32>
    %233 = arith.negf %232 : vector<2x128xf32>
    %234 = math.exp %233 : vector<2x128xf32>
    %cst_51 = arith.constant 1.000000e+00 : f32
    %235 = vector.broadcast %cst_51 : f32 to vector<2x128xf32>
    %236 = arith.addf %235, %234 : vector<2x128xf32>
    %237 = arith.divf %235, %236 : vector<2x128xf32>
    %238 = math.tanh %232 : vector<2x128xf32>
    %239 = arith.select %17, %237, %238 : vector<2x128xi1>, vector<2x128xf32>
    %240 = vector.extract_strided_slice %239 {offsets = [0, 0], sizes = [2, 32], strides = [1, 1]} : vector<2x128xf32> to vector<2x32xf32>
    %241 = vector.extract_strided_slice %239 {offsets = [0, 32], sizes = [2, 32], strides = [1, 1]} : vector<2x128xf32> to vector<2x32xf32>
    %242 = vector.extract_strided_slice %239 {offsets = [0, 64], sizes = [2, 32], strides = [1, 1]} : vector<2x128xf32> to vector<2x32xf32>
    %243 = vector.extract_strided_slice %239 {offsets = [0, 96], sizes = [2, 32], strides = [1, 1]} : vector<2x128xf32> to vector<2x32xf32>
    %244 = arith.mulf %241, %200 : vector<2x32xf32>
    %245 = arith.mulf %240, %243 : vector<2x32xf32>
    %246 = arith.addf %244, %245 : vector<2x32xf32>
    %247 = math.tanh %246 : vector<2x32xf32>
    %248 = arith.mulf %242, %247 : vector<2x32xf32>
    %c0_52 = arith.constant 0 : index
    %c4 = arith.constant 4 : index
    %c0_53 = arith.constant 0 : index
    %249 = vector.load %arg12[%c0_52, %c4, %c0_53] : memref<2x8x32xf32, #tpu.memory_space<vmem>>, vector<2x1x32xf32>
    %250 = vector.shape_cast %249 : vector<2x1x32xf32> to vector<2x32xf32>
    %251 = vector.shape_cast %248 : vector<2x32xf32> to vector<2x1x32xf32>
    tpu.vector_store %arg12[%c0_52, %c4, %c0_53], %251 {strides = array<i32>} : memref<2x8x32xf32, #tpu.memory_space<vmem>>, vector<2x1x32xf32>,
    %252 = vector.extract_strided_slice %8 {offsets = [0, 5, 0], sizes = [2, 1, 128], strides = [1, 1, 1]} : vector<2x8x128xf32> to vector<2x1x128xf32>
    %253 = vector.shape_cast %252 : vector<2x1x128xf32> to vector<2x128xf32>
    %254 = arith.truncf %226 : vector<2x32xf32> to vector<2x32xbf16>
    %cst_54 = arith.constant dense<0.000000e+00> : vector<2x128xf32>
    %255 = tpu.matmul %254, %9, %cst_54 {dimension_numbers = #tpu.dot_dimension_numbers<[1], [0], [0], [1], [0, 0, 1, 1], [], []>} : vector<2x32xbf16>, vector<32x128xbf16>, vector<2x128xf32> -> vector<2x128xf32>
    %256 = arith.addf %253, %255 : vector<2x128xf32>
    %257 = arith.negf %256 : vector<2x128xf32>
    %258 = math.exp %257 : vector<2x128xf32>
    %cst_55 = arith.constant 1.000000e+00 : f32
    %259 = vector.broadcast %cst_55 : f32 to vector<2x128xf32>
    %260 = arith.addf %259, %258 : vector<2x128xf32>
    %261 = arith.divf %259, %260 : vector<2x128xf32>
    %262 = math.tanh %256 : vector<2x128xf32>
    %263 = arith.select %17, %261, %262 : vector<2x128xi1>, vector<2x128xf32>
    %264 = vector.extract_strided_slice %263 {offsets = [0, 0], sizes = [2, 32], strides = [1, 1]} : vector<2x128xf32> to vector<2x32xf32>
    %265 = vector.extract_strided_slice %263 {offsets = [0, 32], sizes = [2, 32], strides = [1, 1]} : vector<2x128xf32> to vector<2x32xf32>
    %266 = vector.extract_strided_slice %263 {offsets = [0, 64], sizes = [2, 32], strides = [1, 1]} : vector<2x128xf32> to vector<2x32xf32>
    %267 = vector.extract_strided_slice %263 {offsets = [0, 96], sizes = [2, 32], strides = [1, 1]} : vector<2x128xf32> to vector<2x32xf32>
    %268 = arith.mulf %265, %224 : vector<2x32xf32>
    %269 = arith.mulf %264, %267 : vector<2x32xf32>
    %270 = arith.addf %268, %269 : vector<2x32xf32>
    %271 = math.tanh %270 : vector<2x32xf32>
    %272 = arith.mulf %266, %271 : vector<2x32xf32>
    %273 = arith.truncf %272 : vector<2x32xf32> to vector<2x32xbf16>
    %cst_56 = arith.constant dense<0.000000e+00> : vector<2x128xf32>
    %274 = tpu.matmul %273, %10, %cst_56 {dimension_numbers = #tpu.dot_dimension_numbers<[1], [0], [0], [1], [0, 0, 1, 1], [], []>} : vector<2x32xbf16>, vector<32x128xbf16>, vector<2x128xf32> -> vector<2x128xf32>
    %275 = arith.addf %274, %14 : vector<2x128xf32>
    %276 = arith.truncf %248 : vector<2x32xf32> to vector<2x32xbf16>
    %cst_57 = arith.constant dense<0.000000e+00> : vector<2x128xf32>
    %277 = tpu.matmul %276, %11, %cst_57 {dimension_numbers = #tpu.dot_dimension_numbers<[1], [0], [0], [1], [0, 0, 1, 1], [], []>} : vector<2x32xbf16>, vector<32x128xbf16>, vector<2x128xf32> -> vector<2x128xf32>
    %278 = arith.addf %275, %277 : vector<2x128xf32>
    %279 = arith.negf %278 : vector<2x128xf32>
    %280 = math.exp %279 : vector<2x128xf32>
    %cst_58 = arith.constant 1.000000e+00 : f32
    %281 = vector.broadcast %cst_58 : f32 to vector<2x128xf32>
    %282 = arith.addf %281, %280 : vector<2x128xf32>
    %283 = arith.divf %281, %282 : vector<2x128xf32>
    %284 = math.tanh %278 : vector<2x128xf32>
    %285 = arith.select %17, %283, %284 : vector<2x128xi1>, vector<2x128xf32>
    %286 = vector.extract_strided_slice %285 {offsets = [0, 0], sizes = [2, 32], strides = [1, 1]} : vector<2x128xf32> to vector<2x32xf32>
    %287 = vector.extract_strided_slice %285 {offsets = [0, 32], sizes = [2, 32], strides = [1, 1]} : vector<2x128xf32> to vector<2x32xf32>
    %288 = vector.extract_strided_slice %285 {offsets = [0, 64], sizes = [2, 32], strides = [1, 1]} : vector<2x128xf32> to vector<2x32xf32>
    %289 = vector.extract_strided_slice %285 {offsets = [0, 96], sizes = [2, 32], strides = [1, 1]} : vector<2x128xf32> to vector<2x32xf32>
    %290 = arith.mulf %287, %246 : vector<2x32xf32>
    %291 = arith.mulf %286, %289 : vector<2x32xf32>
    %292 = arith.addf %290, %291 : vector<2x32xf32>
    %293 = math.tanh %292 : vector<2x32xf32>
    %294 = arith.mulf %288, %293 : vector<2x32xf32>
    %c0_59 = arith.constant 0 : index
    %c5 = arith.constant 5 : index
    %c0_60 = arith.constant 0 : index
    %295 = vector.load %arg12[%c0_59, %c5, %c0_60] : memref<2x8x32xf32, #tpu.memory_space<vmem>>, vector<2x1x32xf32>
    %296 = vector.shape_cast %295 : vector<2x1x32xf32> to vector<2x32xf32>
    %297 = vector.shape_cast %294 : vector<2x32xf32> to vector<2x1x32xf32>
    tpu.vector_store %arg12[%c0_59, %c5, %c0_60], %297 {strides = array<i32>} : memref<2x8x32xf32, #tpu.memory_space<vmem>>, vector<2x1x32xf32>,
    %298 = vector.extract_strided_slice %8 {offsets = [0, 6, 0], sizes = [2, 1, 128], strides = [1, 1, 1]} : vector<2x8x128xf32> to vector<2x1x128xf32>
    %299 = vector.shape_cast %298 : vector<2x1x128xf32> to vector<2x128xf32>
    %300 = arith.truncf %272 : vector<2x32xf32> to vector<2x32xbf16>
    %cst_61 = arith.constant dense<0.000000e+00> : vector<2x128xf32>
    %301 = tpu.matmul %300, %9, %cst_61 {dimension_numbers = #tpu.dot_dimension_numbers<[1], [0], [0], [1], [0, 0, 1, 1], [], []>} : vector<2x32xbf16>, vector<32x128xbf16>, vector<2x128xf32> -> vector<2x128xf32>
    %302 = arith.addf %299, %301 : vector<2x128xf32>
    %303 = arith.negf %302 : vector<2x128xf32>
    %304 = math.exp %303 : vector<2x128xf32>
    %cst_62 = arith.constant 1.000000e+00 : f32
    %305 = vector.broadcast %cst_62 : f32 to vector<2x128xf32>
    %306 = arith.addf %305, %304 : vector<2x128xf32>
    %307 = arith.divf %305, %306 : vector<2x128xf32>
    %308 = math.tanh %302 : vector<2x128xf32>
    %309 = arith.select %17, %307, %308 : vector<2x128xi1>, vector<2x128xf32>
    %310 = vector.extract_strided_slice %309 {offsets = [0, 0], sizes = [2, 32], strides = [1, 1]} : vector<2x128xf32> to vector<2x32xf32>
    %311 = vector.extract_strided_slice %309 {offsets = [0, 32], sizes = [2, 32], strides = [1, 1]} : vector<2x128xf32> to vector<2x32xf32>
    %312 = vector.extract_strided_slice %309 {offsets = [0, 64], sizes = [2, 32], strides = [1, 1]} : vector<2x128xf32> to vector<2x32xf32>
    %313 = vector.extract_strided_slice %309 {offsets = [0, 96], sizes = [2, 32], strides = [1, 1]} : vector<2x128xf32> to vector<2x32xf32>
    %314 = arith.mulf %311, %270 : vector<2x32xf32>
    %315 = arith.mulf %310, %313 : vector<2x32xf32>
    %316 = arith.addf %314, %315 : vector<2x32xf32>
    %317 = math.tanh %316 : vector<2x32xf32>
    %318 = arith.mulf %312, %317 : vector<2x32xf32>
    %319 = arith.truncf %318 : vector<2x32xf32> to vector<2x32xbf16>
    %cst_63 = arith.constant dense<0.000000e+00> : vector<2x128xf32>
    %320 = tpu.matmul %319, %10, %cst_63 {dimension_numbers = #tpu.dot_dimension_numbers<[1], [0], [0], [1], [0, 0, 1, 1], [], []>} : vector<2x32xbf16>, vector<32x128xbf16>, vector<2x128xf32> -> vector<2x128xf32>
    %321 = arith.addf %320, %14 : vector<2x128xf32>
    %322 = arith.truncf %294 : vector<2x32xf32> to vector<2x32xbf16>
    %cst_64 = arith.constant dense<0.000000e+00> : vector<2x128xf32>
    %323 = tpu.matmul %322, %11, %cst_64 {dimension_numbers = #tpu.dot_dimension_numbers<[1], [0], [0], [1], [0, 0, 1, 1], [], []>} : vector<2x32xbf16>, vector<32x128xbf16>, vector<2x128xf32> -> vector<2x128xf32>
    %324 = arith.addf %321, %323 : vector<2x128xf32>
    %325 = arith.negf %324 : vector<2x128xf32>
    %326 = math.exp %325 : vector<2x128xf32>
    %cst_65 = arith.constant 1.000000e+00 : f32
    %327 = vector.broadcast %cst_65 : f32 to vector<2x128xf32>
    %328 = arith.addf %327, %326 : vector<2x128xf32>
    %329 = arith.divf %327, %328 : vector<2x128xf32>
    %330 = math.tanh %324 : vector<2x128xf32>
    %331 = arith.select %17, %329, %330 : vector<2x128xi1>, vector<2x128xf32>
    %332 = vector.extract_strided_slice %331 {offsets = [0, 0], sizes = [2, 32], strides = [1, 1]} : vector<2x128xf32> to vector<2x32xf32>
    %333 = vector.extract_strided_slice %331 {offsets = [0, 32], sizes = [2, 32], strides = [1, 1]} : vector<2x128xf32> to vector<2x32xf32>
    %334 = vector.extract_strided_slice %331 {offsets = [0, 64], sizes = [2, 32], strides = [1, 1]} : vector<2x128xf32> to vector<2x32xf32>
    %335 = vector.extract_strided_slice %331 {offsets = [0, 96], sizes = [2, 32], strides = [1, 1]} : vector<2x128xf32> to vector<2x32xf32>
    %336 = arith.mulf %333, %292 : vector<2x32xf32>
    %337 = arith.mulf %332, %335 : vector<2x32xf32>
    %338 = arith.addf %336, %337 : vector<2x32xf32>
    %339 = math.tanh %338 : vector<2x32xf32>
    %340 = arith.mulf %334, %339 : vector<2x32xf32>
    %c0_66 = arith.constant 0 : index
    %c6 = arith.constant 6 : index
    %c0_67 = arith.constant 0 : index
    %341 = vector.load %arg12[%c0_66, %c6, %c0_67] : memref<2x8x32xf32, #tpu.memory_space<vmem>>, vector<2x1x32xf32>
    %342 = vector.shape_cast %341 : vector<2x1x32xf32> to vector<2x32xf32>
    %343 = vector.shape_cast %340 : vector<2x32xf32> to vector<2x1x32xf32>
    tpu.vector_store %arg12[%c0_66, %c6, %c0_67], %343 {strides = array<i32>} : memref<2x8x32xf32, #tpu.memory_space<vmem>>, vector<2x1x32xf32>,
    %344 = vector.extract_strided_slice %8 {offsets = [0, 7, 0], sizes = [2, 1, 128], strides = [1, 1, 1]} : vector<2x8x128xf32> to vector<2x1x128xf32>
    %345 = vector.shape_cast %344 : vector<2x1x128xf32> to vector<2x128xf32>
    %346 = arith.truncf %318 : vector<2x32xf32> to vector<2x32xbf16>
    %cst_68 = arith.constant dense<0.000000e+00> : vector<2x128xf32>
    %347 = tpu.matmul %346, %9, %cst_68 {dimension_numbers = #tpu.dot_dimension_numbers<[1], [0], [0], [1], [0, 0, 1, 1], [], []>} : vector<2x32xbf16>, vector<32x128xbf16>, vector<2x128xf32> -> vector<2x128xf32>
    %348 = arith.addf %345, %347 : vector<2x128xf32>
    %349 = arith.negf %348 : vector<2x128xf32>
    %350 = math.exp %349 : vector<2x128xf32>
    %cst_69 = arith.constant 1.000000e+00 : f32
    %351 = vector.broadcast %cst_69 : f32 to vector<2x128xf32>
    %352 = arith.addf %351, %350 : vector<2x128xf32>
    %353 = arith.divf %351, %352 : vector<2x128xf32>
    %354 = math.tanh %348 : vector<2x128xf32>
    %355 = arith.select %17, %353, %354 : vector<2x128xi1>, vector<2x128xf32>
    %356 = vector.extract_strided_slice %355 {offsets = [0, 0], sizes = [2, 32], strides = [1, 1]} : vector<2x128xf32> to vector<2x32xf32>
    %357 = vector.extract_strided_slice %355 {offsets = [0, 32], sizes = [2, 32], strides = [1, 1]} : vector<2x128xf32> to vector<2x32xf32>
    %358 = vector.extract_strided_slice %355 {offsets = [0, 64], sizes = [2, 32], strides = [1, 1]} : vector<2x128xf32> to vector<2x32xf32>
    %359 = vector.extract_strided_slice %355 {offsets = [0, 96], sizes = [2, 32], strides = [1, 1]} : vector<2x128xf32> to vector<2x32xf32>
    %360 = arith.mulf %357, %316 : vector<2x32xf32>
    %361 = arith.mulf %356, %359 : vector<2x32xf32>
    %362 = arith.addf %360, %361 : vector<2x32xf32>
    %363 = math.tanh %362 : vector<2x32xf32>
    %364 = arith.mulf %358, %363 : vector<2x32xf32>
    %365 = arith.truncf %364 : vector<2x32xf32> to vector<2x32xbf16>
    %cst_70 = arith.constant dense<0.000000e+00> : vector<2x128xf32>
    %366 = tpu.matmul %365, %10, %cst_70 {dimension_numbers = #tpu.dot_dimension_numbers<[1], [0], [0], [1], [0, 0, 1, 1], [], []>} : vector<2x32xbf16>, vector<32x128xbf16>, vector<2x128xf32> -> vector<2x128xf32>
    %367 = arith.addf %366, %14 : vector<2x128xf32>
    %368 = arith.truncf %340 : vector<2x32xf32> to vector<2x32xbf16>
    %cst_71 = arith.constant dense<0.000000e+00> : vector<2x128xf32>
    %369 = tpu.matmul %368, %11, %cst_71 {dimension_numbers = #tpu.dot_dimension_numbers<[1], [0], [0], [1], [0, 0, 1, 1], [], []>} : vector<2x32xbf16>, vector<32x128xbf16>, vector<2x128xf32> -> vector<2x128xf32>
    %370 = arith.addf %367, %369 : vector<2x128xf32>
    %371 = arith.negf %370 : vector<2x128xf32>
    %372 = math.exp %371 : vector<2x128xf32>
    %cst_72 = arith.constant 1.000000e+00 : f32
    %373 = vector.broadcast %cst_72 : f32 to vector<2x128xf32>
    %374 = arith.addf %373, %372 : vector<2x128xf32>
    %375 = arith.divf %373, %374 : vector<2x128xf32>
    %376 = math.tanh %370 : vector<2x128xf32>
    %377 = arith.select %17, %375, %376 : vector<2x128xi1>, vector<2x128xf32>
    %378 = vector.extract_strided_slice %377 {offsets = [0, 0], sizes = [2, 32], strides = [1, 1]} : vector<2x128xf32> to vector<2x32xf32>
    %379 = vector.extract_strided_slice %377 {offsets = [0, 32], sizes = [2, 32], strides = [1, 1]} : vector<2x128xf32> to vector<2x32xf32>
    %380 = vector.extract_strided_slice %377 {offsets = [0, 64], sizes = [2, 32], strides = [1, 1]} : vector<2x128xf32> to vector<2x32xf32>
    %381 = vector.extract_strided_slice %377 {offsets = [0, 96], sizes = [2, 32], strides = [1, 1]} : vector<2x128xf32> to vector<2x32xf32>
    %382 = arith.mulf %379, %338 : vector<2x32xf32>
    %383 = arith.mulf %378, %381 : vector<2x32xf32>
    %384 = arith.addf %382, %383 : vector<2x32xf32>
    %385 = math.tanh %384 : vector<2x32xf32>
    %386 = arith.mulf %380, %385 : vector<2x32xf32>
    %c0_73 = arith.constant 0 : index
    %c7 = arith.constant 7 : index
    %c0_74 = arith.constant 0 : index
    %387 = vector.load %arg12[%c0_73, %c7, %c0_74] : memref<2x8x32xf32, #tpu.memory_space<vmem>>, vector<2x1x32xf32>
    %388 = vector.shape_cast %387 : vector<2x1x32xf32> to vector<2x32xf32>
    %389 = vector.shape_cast %386 : vector<2x32xf32> to vector<2x1x32xf32>
    tpu.vector_store %arg12[%c0_73, %c7, %c0_74], %389 {strides = array<i32>} : memref<2x8x32xf32, #tpu.memory_space<vmem>>, vector<2x1x32xf32>,
    %c0_75 = arith.constant 0 : index
    %c0_76 = arith.constant 0 : index
    %c0_77 = arith.constant 0 : index
    %390 = vector.load %arg12[%c0_75, %c0_76, %c0_77] : memref<2x8x32xf32, #tpu.memory_space<vmem>>, vector<2x8x32xf32>
    %391 = vector.shape_cast %390 : vector<2x8x32xf32> to vector<16x32xf32>
    %392 = arith.truncf %391 : vector<16x32xf32> to vector<16x32xbf16>
    %c0_78 = arith.constant 0 : index
    %c0_79 = arith.constant 0 : index
    %393 = vector.load %arg7[%c0_78, %c0_79] : memref<32x4xbf16, #tpu.memory_space<vmem>>, vector<32x4xbf16>
    %cst_80 = arith.constant dense<0.000000e+00> : vector<16x4xf32>
    %394 = tpu.matmul %392, %393, %cst_80 {dimension_numbers = #tpu.dot_dimension_numbers<[1], [0], [0], [1], [0, 0, 1, 1], [], []>} : vector<16x32xbf16>, vector<32x4xbf16>, vector<16x4xf32> -> vector<16x4xf32>
    %c0_81 = arith.constant 0 : index
    %c0_82 = arith.constant 0 : index
    %395 = vector.load %arg8[%c0_81, %c0_82] : memref<1x4xf32, #tpu.memory_space<vmem>>, vector<1x4xf32>
    %396 = vector.broadcast %395 : vector<1x4xf32> to vector<16x4xf32>
    %397 = arith.addf %394, %396 : vector<16x4xf32>
    %398 = vector.shape_cast %397 : vector<16x4xf32> to vector<2x8x4xf32>
    %c0_83 = arith.constant 0 : index
    %c0_84 = arith.constant 0 : index
    %c0_85 = arith.constant 0 : index
    %399 = vector.load %arg9[%c0_83, %c0_84, %c0_85] : memref<2x8x4xf32, #tpu.memory_space<vmem>>, vector<2x8x4xf32>
    tpu.vector_store %arg9[%c0_83, %c0_84, %c0_85], %398 {strides = array<i32>} : memref<2x8x4xf32, #tpu.memory_space<vmem>>, vector<2x8x4xf32>,
    %c0_86 = arith.constant 0 : index
    %c0_87 = arith.constant 0 : index
    %c0_88 = arith.constant 0 : index
    %400 = vector.load %arg10[%c0_86, %c0_87, %c0_88] : memref<2x2x32xf32, #tpu.memory_space<vmem>>, vector<1x2x32xf32>
    %401 = vector.shape_cast %400 : vector<1x2x32xf32> to vector<2x32xf32>
    %402 = vector.shape_cast %364 : vector<2x32xf32> to vector<1x2x32xf32>
    tpu.vector_store %arg10[%c0_86, %c0_87, %c0_88], %402 {strides = array<i32>} : memref<2x2x32xf32, #tpu.memory_space<vmem>>, vector<1x2x32xf32>,
    %c1_89 = arith.constant 1 : index
    %c0_90 = arith.constant 0 : index
    %c0_91 = arith.constant 0 : index
    %403 = vector.load %arg10[%c1_89, %c0_90, %c0_91] : memref<2x2x32xf32, #tpu.memory_space<vmem>>, vector<1x2x32xf32>
    %404 = vector.shape_cast %403 : vector<1x2x32xf32> to vector<2x32xf32>
    %405 = vector.shape_cast %386 : vector<2x32xf32> to vector<1x2x32xf32>
    tpu.vector_store %arg10[%c1_89, %c0_90, %c0_91], %405 {strides = array<i32>} : memref<2x2x32xf32, #tpu.memory_space<vmem>>, vector<1x2x32xf32>,
    %c0_92 = arith.constant 0 : index
    %c0_93 = arith.constant 0 : index
    %c0_94 = arith.constant 0 : index
    %406 = vector.load %arg11[%c0_92, %c0_93, %c0_94] : memref<2x2x32xf32, #tpu.memory_space<vmem>>, vector<1x2x32xf32>
    %407 = vector.shape_cast %406 : vector<1x2x32xf32> to vector<2x32xf32>
    %408 = vector.shape_cast %362 : vector<2x32xf32> to vector<1x2x32xf32>
    tpu.vector_store %arg11[%c0_92, %c0_93, %c0_94], %408 {strides = array<i32>} : memref<2x2x32xf32, #tpu.memory_space<vmem>>, vector<1x2x32xf32>,
    %c1_95 = arith.constant 1 : index
    %c0_96 = arith.constant 0 : index
    %c0_97 = arith.constant 0 : index
    %409 = vector.load %arg11[%c1_95, %c0_96, %c0_97] : memref<2x2x32xf32, #tpu.memory_space<vmem>>, vector<1x2x32xf32>
    %410 = vector.shape_cast %409 : vector<1x2x32xf32> to vector<2x32xf32>
    %411 = vector.shape_cast %384 : vector<2x32xf32> to vector<1x2x32xf32>
    tpu.vector_store %arg11[%c1_95, %c0_96, %c0_97], %411 {strides = array<i32>} : memref<2x2x32xf32, #tpu.memory_space<vmem>>, vector<1x2x32xf32>,
    return
  }
}

</mosaic_0001>

<llo_original>
// kernel: net_forward.1
$region0: #{net_forward.1}
  #allocation0 [shape = 'u32[]', space=smem, size = 0x4, offset = 0x4, fixed_abs, tag = 'smem constant byte address 0x4 - core index']
  #allocation1 [shape = 'u32[144,128]{1,0:T(1,128)}', space=vmem, size = 0x12000, scoped, tag = 'internal scratch']
  #allocation2 [shape = 'f32[2,8,32]{2,1,0:T(8,128)}', space=vmem, size = 0x2000, scoped, tag = 'scratch operand']
  %s0 = inlined_call_operand.vmem [shape: f32[2,8,8], index: 0, kind: input, shape index: {}]
  %s1 = inlined_call_operand.vmem [shape: bf16[8,128], index: 1, kind: input, shape index: {}]
  %s2 = inlined_call_operand.vmem [shape: bf16[32,128], index: 2, kind: input, shape index: {}]
  %s3 = inlined_call_operand.hbm [shape: f32[1,128], index: 3, kind: input, shape index: {}]
  %s4 = inlined_call_operand.hbm [shape: bf16[32,128], index: 4, kind: input, shape index: {}]
  %s5 = inlined_call_operand.hbm [shape: bf16[32,128], index: 5, kind: input, shape index: {}]
  %s6 = inlined_call_operand.hbm [shape: f32[1,128], index: 6, kind: input, shape index: {}]
  %s7 = inlined_call_operand.vmem [shape: bf16[32,4], index: 7, kind: input, shape index: {}]
  %s8 = inlined_call_operand.hbm [shape: f32[1,4], index: 8, kind: input, shape index: {}]
  %s9 = inlined_call_operand.vmem [shape: f32[2,8,4], index: 9, kind: output, shape index: {0}]
  %s10 = inlined_call_operand.hbm [shape: f32[2,2,32], index: 10, kind: output, shape index: {1}]
  %s11 = inlined_call_operand.hbm [shape: f32[2,2,32], index: 11, kind: output, shape index: {2}]
  %12 = xla_tuple %s9, %s10, %s11
  %s13 = sld [smem:[#allocation0]]
  $region82: #{net_forward.1} parent=0
    _
  %s15 = ssub.s32 1, %s13
  %s16 = scalar_select 0, %s15, %s13
  $region1: #{net_forward.1} parent=0
    #allocation3 [shape = 'u8[512]{0}', space=vmem, size = 0x400, scoped, tag = 'input window, operand 3, single buffered']
    #allocation4 [shape = 's32[1]{0}', space=sflag, size = 0x4, scoped, tag = 'scoped memory for net_forward.1']
    #allocation5 [shape = 's32[1]{0}', space=sflag, size = 0x4, scoped, tag = 'scoped memory for net_forward.1']
    #allocation6 [shape = 'u8[8192]{0}', space=vmem, size = 0x2000, scoped, tag = 'input window, operand 4, single buffered']
    #allocation7 [shape = 's32[1]{0}', space=sflag, size = 0x4, scoped, tag = 'scoped memory for net_forward.1']
    #allocation8 [shape = 'u8[8192]{0}', space=vmem, size = 0x2000, scoped, tag = 'input window, operand 5, single buffered']
    #allocation9 [shape = 'u8[512]{0}', space=vmem, size = 0x400, scoped, tag = 'input window, operand 6, single buffered']
    #allocation10 [shape = 's32[1]{0}', space=sflag, size = 0x4, scoped, tag = 'scoped memory for net_forward.1']
    #allocation11 [shape = 'u8[512]{0}', space=vmem, size = 0x400, scoped, tag = 'input window, operand 8, single buffered']
    #allocation12 [shape = 'u8[2048]{0}', space=vmem, size = 0x800, scoped, tag = 'output window, operand 1, single buffered']
    #allocation13 [shape = 'u8[2048]{0}', space=vmem, size = 0x800, scoped, tag = 'output window, operand 2, single buffered']
    #allocation14 [shape = 's32[1]{0}', space=sflag, size = 0x4, scoped, tag = 'scoped memory for net_forward.1']
    %17 = vsyncpa [#allocation4], 0
    %18 = vsyncpa [#allocation7], 0
    %19 = vsyncpa [#allocation10], 0
    %20 = vsyncpa [#allocation5], 0
    %21 = vsyncpa [#allocation14], 0
    // Predicated region
    $region2: #{net_forward.1} parent=1 // pred_check
      _
    $region3: #{net_forward.1} parent=1 // pred_check_branch
      %23 = sbr.rel (0) target = $region5
    $region4: #{net_forward.1} parent=1 // pred_region
      _
    $region5: #{net_forward.1} parent=1 // pred_fallthru
      _
    // Predicated region
    $region6: #{net_forward.1} parent=1 // pred_check
      _
    $region7: #{net_forward.1} parent=1 // pred_check_branch
      %25 = sbr.rel (0) target = $region9
    $region8: #{net_forward.1} parent=1 // pred_region
      _
    $region9: #{net_forward.1} parent=1 // pred_fallthru
      _
    // Predicated region
    $region10: #{net_forward.1} parent=1 // pred_check
      _
    $region11: #{net_forward.1} parent=1 // pred_check_branch
      %27 = sbr.rel (0) target = $region13
    $region12: #{net_forward.1} parent=1 // pred_region
      _
    $region13: #{net_forward.1} parent=1 // pred_fallthru
      _
    // Predicated region
    $region14: #{net_forward.1} parent=1 // pred_check
      _
    $region15: #{net_forward.1} parent=1 // pred_check_branch
      %29 = sbr.rel (0) target = $region17
    $region16: #{net_forward.1} parent=1 // pred_region
      %s31 = ssub.s32 16, 16
      %32 = vsyncadd [#allocation4], %s31
      %s34 = sshll.u32 [#allocation3], 4
      %s35 = int_to_ptr.vmem [resolvable:$true] %s34
      %37 = dma.hbm_to_vmem [thread:$0]  %s3, 16, %s35, [#allocation4]
    $region17: #{net_forward.1} parent=1 // pred_fallthru
      _
    // Predicated region
    $region18: #{net_forward.1} parent=1 // pred_check
      _
    $region19: #{net_forward.1} parent=1 // pred_check_branch
      %39 = sbr.rel (0) target = $region21
    $region20: #{net_forward.1} parent=1 // pred_region
      %s41 = ssub.s32 256, 256
      %42 = vsyncadd [#allocation7], %s41
      %s43 = sshll.u32 [#allocation6], 4
      %s44 = int_to_ptr.vmem [resolvable:$true] %s43
      %49 = dma.hbm_to_vmem [thread:$0]  %s4, 256, %s44, [#allocation7], 64, 64, 4
    $region21: #{net_forward.1} parent=1 // pred_fallthru
      _
    // Predicated region
    $region22: #{net_forward.1} parent=1 // pred_check
      _
    $region23: #{net_forward.1} parent=1 // pred_check_branch
      %51 = sbr.rel (0) target = $region25
    $region24: #{net_forward.1} parent=1 // pred_region
      %s53 = ssub.s32 256, 256
      %54 = vsyncadd [#allocation7], %s53
      %s55 = sshll.u32 [#allocation8], 4
      %s56 = int_to_ptr.vmem [resolvable:$true] %s55
      %61 = dma.hbm_to_vmem [thread:$0]  %s5, 256, %s56, [#allocation7], 64, 64, 4
    $region25: #{net_forward.1} parent=1 // pred_fallthru
      _
    // Predicated region
    $region26: #{net_forward.1} parent=1 // pred_check
      _
    $region27: #{net_forward.1} parent=1 // pred_check_branch
      %63 = sbr.rel (0) target = $region29
    $region28: #{net_forward.1} parent=1 // pred_region
      %s65 = ssub.s32 16, 16
      %66 = vsyncadd [#allocation10], %s65
      %s68 = sshll.u32 [#allocation9], 4
      %s69 = int_to_ptr.vmem [resolvable:$true] %s68
      %71 = dma.hbm_to_vmem [thread:$0]  %s6, 16, %s69, [#allocation10]
    $region29: #{net_forward.1} parent=1 // pred_fallthru
      _
    // Predicated region
    $region30: #{net_forward.1} parent=1 // pred_check
      _
    $region31: #{net_forward.1} parent=1 // pred_check_branch
      %73 = sbr.rel (0) target = $region33
    $region32: #{net_forward.1} parent=1 // pred_region
      _
    $region33: #{net_forward.1} parent=1 // pred_fallthru
      _
    // Predicated region
    $region34: #{net_forward.1} parent=1 // pred_check
      _
    $region35: #{net_forward.1} parent=1 // pred_check_branch
      %75 = sbr.rel (0) target = $region37
    $region36: #{net_forward.1} parent=1 // pred_region
      %s77 = ssub.s32 16, 16
      %78 = vsyncadd [#allocation10], %s77
      %s80 = sshll.u32 [#allocation11], 4
      %s81 = int_to_ptr.vmem [resolvable:$true] %s80
      %83 = dma.hbm_to_vmem [thread:$0]  %s8, 16, %s81, [#allocation10]
    $region37: #{net_forward.1} parent=1 // pred_fallthru
      _
    // Predicated region
    $region38: #{net_forward.1} parent=1 // pred_check
      _
    $region39: #{net_forward.1} parent=1 // pred_check_branch
      %85 = sbr.rel (0) target = $region41
    $region40: #{net_forward.1} parent=1 // pred_region
      %86 = dma.done [#allocation4], 16
    $region41: #{net_forward.1} parent=1 // pred_fallthru
      _
    // Predicated region
    $region42: #{net_forward.1} parent=1 // pred_check
      _
    $region43: #{net_forward.1} parent=1 // pred_check_branch
      %88 = sbr.rel (0) target = $region45
    $region44: #{net_forward.1} parent=1 // pred_region
      %89 = dma.done [#allocation7], 256
    $region45: #{net_forward.1} parent=1 // pred_fallthru
      _
    // Predicated region
    $region46: #{net_forward.1} parent=1 // pred_check
      _
    $region47: #{net_forward.1} parent=1 // pred_check_branch
      %91 = sbr.rel (0) target = $region49
    $region48: #{net_forward.1} parent=1 // pred_region
      %92 = dma.done [#allocation7], 256
    $region49: #{net_forward.1} parent=1 // pred_fallthru
      _
    // Predicated region
    $region50: #{net_forward.1} parent=1 // pred_check
      _
    $region51: #{net_forward.1} parent=1 // pred_check_branch
      %94 = sbr.rel (0) target = $region53
    $region52: #{net_forward.1} parent=1 // pred_region
      %95 = dma.done [#allocation10], 16
    $region53: #{net_forward.1} parent=1 // pred_fallthru
      _
    // Predicated region
    $region54: #{net_forward.1} parent=1 // pred_check
      _
    $region55: #{net_forward.1} parent=1 // pred_check_branch
      %97 = sbr.rel (0) target = $region57
    $region56: #{net_forward.1} parent=1 // pred_region
      %98 = dma.done [#allocation10], 16
    $region57: #{net_forward.1} parent=1 // pred_fallthru
      _
    %v100 = vld [vmem:[%s0] sm:$0xff]
    %v101 = vld [vmem:[%s0 + $0x8] sm:$0xff]
    %v102 = vpack.c.bf16 %v101, %v100
    %v103 = vld [vmem:[%s1] sm:$0xf]
    %v104 = vld [vmem:[#allocation3] sm:$0x1]
    %v106 = vlaneseq
    %v107 = vshrl.u32 %v106, 7
    %v108 = vsub.s32 0, %v107
    %v109 = vrot.slane %v104, %v108
    %vm111 = vcmask 64512
    %v113 = vsel %vm111, %v102, 0
    %vm115 = vcmask 1043456
    %v117 = vsel %vm115, %v103, 0
    %119 = vmatprep.subr.bf16.mxu0 0
    %120 = vmatpush1.bf16.msra.mxu0 %v117
    %121 = vmatprep.subr.bf16.mxu0 0
    %122 = vmatpush1.bf16.msra.mxu0 0
    %123 = vmatprep.subr.bf16.mxu0 0
    %124 = vmatpush1.bf16.msra.mxu0 0
    %125 = vmatprep.subr.bf16.mxu0 0
    %126 = vmatpush1.bf16.msra.mxu0 0
    %127 = vmatprep.subr.bf16.mxu0 0
    %128 = vmatpush1.bf16.msra.mxu0 0
    %129 = vmatprep.subr.bf16.mxu0 0
    %130 = vmatpush1.bf16.msra.mxu0 0
    %131 = vmatprep.subr.bf16.mxu0 0
    %132 = vmatpush1.bf16.msra.mxu0 0
    %133 = vmatprep.subr.bf16.mxu0 0
    %134 = vmatpush1.bf16.msra.mxu0 0
    %135 = vmatprep.subr.bf16.mxu0 0
    %136 = vmatpush1.bf16.msra.mxu0 0
    %137 = vmatprep.subr.bf16.mxu0 0
    %138 = vmatpush1.bf16.msra.mxu0 0
    %139 = vmatprep.subr.bf16.mxu0 0
    %140 = vmatpush1.bf16.msra.mxu0 0
    %141 = vmatprep.subr.bf16.mxu0 0
    %142 = vmatpush1.bf16.msra.mxu0 0
    %143 = vmatprep.subr.bf16.mxu0 0
    %144 = vmatpush1.bf16.msra.mxu0 0
    %145 = vmatprep.subr.bf16.mxu0 0
    %146 = vmatpush1.bf16.msra.mxu0 0
    %147 = vmatprep.subr.bf16.mxu0 0
    %148 = vmatpush1.bf16.msra.mxu0 0
    %149 = vmatprep.subr.bf16.mxu0 0
    %150 = vmatpush1.bf16.msra.mxu0 0
    %151 = vmatprep.mubr.bf16.mxu0 0
    %152 = vmatmul.mubr.bf16.gmra.mrb[0].mxu0 %v113
    %v153 = vpop.f32.mrb[0].mxu0
    %v154 = vadd.f32 %v109, %v153
    %v155 = vpop.f32.mrb[0].mxu0
    %v156 = vpop.f32.mrb[0].mxu0
    %v157 = vadd.f32 %v109, %v156
    %v158 = vpop.f32.mrb[0].mxu0
    %159 = vdwg.mxu0
    %v160 = vld [vmem:[%s2] sm:$0xf]
    %v161 = vld [vmem:[%s2 + $0x4] sm:$0xf]
    %v162 = vld [vmem:[%s2 + $0x8] sm:$0xf]
    %v163 = vld [vmem:[%s2 + $0xc] sm:$0xf]
    %v164 = vld [vmem:[#allocation6] sm:$0xf]
    %v165 = vld [vmem:[#allocation6 + $0x4] sm:$0xf]
    %v166 = vld [vmem:[#allocation6 + $0x8] sm:$0xf]
    %v167 = vld [vmem:[#allocation6 + $0xc] sm:$0xf]
    %v168 = vld [vmem:[#allocation8] sm:$0xf]
    %v169 = vld [vmem:[#allocation8 + $0x4] sm:$0xf]
    %v170 = vld [vmem:[#allocation8 + $0x8] sm:$0xf]
    %v171 = vld [vmem:[#allocation8 + $0xc] sm:$0xf]
    %v172 = vld [vmem:[#allocation9] sm:$0x1]
    %v174 = vlaneseq
    %v175 = vshrl.u32 %v174, 7
    %v176 = vsub.s32 0, %v175
    %v177 = vrot.slane %v172, %v176
    %v179 = vlaneseq
    %v180 = vand.u32 %v179, 127
    %vm181 = vcmp.lt.s32.totalorder %v180, 96
    %v186 = vunpack.c.l.b16 %v160
    %v187 = vunpack.c.l.b16 %v161
    %v188 = vunpack.c.l.b16 %v162
    %v189 = vunpack.c.l.b16 %v163
    %v190 = vpack.c.b16 %v187, %v186
    %v191 = vpack.c.b16 %v189, %v188
    %vm194 = vcmask 261120
    %v196 = vsel %vm194, 0, 0
    %198 = vmatprep.subr.bf16.mxu0 0
    %199 = vmatpush1.bf16.msra.mxu0 %v190
    %200 = vmatprep.subr.bf16.mxu0 0
    %201 = vmatpush1.bf16.msra.mxu0 %v191
    %202 = vmatprep.subr.bf16.mxu0 0
    %203 = vmatpush1.bf16.msra.mxu0 0
    %204 = vmatprep.subr.bf16.mxu0 0
    %205 = vmatpush1.bf16.msra.mxu0 0
    %206 = vmatprep.subr.bf16.mxu0 0
    %207 = vmatpush1.bf16.msra.mxu0 0
    %208 = vmatprep.subr.bf16.mxu0 0
    %209 = vmatpush1.bf16.msra.mxu0 0
    %210 = vmatprep.subr.bf16.mxu0 0
    %211 = vmatpush1.bf16.msra.mxu0 0
    %212 = vmatprep.subr.bf16.mxu0 0
    %213 = vmatpush1.bf16.msra.mxu0 0
    %214 = vmatprep.subr.bf16.mxu0 0
    %215 = vmatpush1.bf16.msra.mxu0 0
    %216 = vmatprep.subr.bf16.mxu0 0
    %217 = vmatpush1.bf16.msra.mxu0 0
    %218 = vmatprep.subr.bf16.mxu0 0
    %219 = vmatpush1.bf16.msra.mxu0 0
    %220 = vmatprep.subr.bf16.mxu0 0
    %221 = vmatpush1.bf16.msra.mxu0 0
    %222 = vmatprep.subr.bf16.mxu0 0
    %223 = vmatpush1.bf16.msra.mxu0 0
    %224 = vmatprep.subr.bf16.mxu0 0
    %225 = vmatpush1.bf16.msra.mxu0 0
    %226 = vmatprep.subr.bf16.mxu0 0
    %227 = vmatpush1.bf16.msra.mxu0 0
    %228 = vmatprep.subr.bf16.mxu0 0
    %229 = vmatpush1.bf16.msra.mxu0 0
    %230 = vmatprep.mubr.bf16.mxu0 0
    %231 = vmatmul.mubr.bf16.gmra.mrb[0].mxu0 %v196
    %v232 = vpop.f32.mrb[0].mxu0
    %v233 = vadd.f32 0.0, %v232
    %v234 = vpop.f32.mrb[0].mxu0
    %v235 = vpop.f32.mrb[0].mxu0
    %v236 = vpop.f32.mrb[0].mxu0
    %237 = vdwg.mxu0
    %v239 = vrot.slane %v233, 1
    %v242 = vadd.f32 %v154, %v233
    %v243 = vadd.f32 %v157, %v239
    %v244 = vxor.u32 %v242, 2147483648
    %v245 = vxor.u32 %v243, 2147483648
    %v246 = vmul.f32 %v244, 1.442695
    %v247 = vpow.pop %v246
    %v248 = vmul.f32 %v245, 1.442695
    %v249 = vpow.pop %v248
    %v250 = vadd.f32 %v247, 1.0
    %v251 = vadd.f32 %v249, 1.0
    %v252 = vrcp.pop %v250
    %v253 = vmul.f32 1.0, %v252
    %v254 = vrcp.pop %v251
    %v255 = vmul.f32 1.0, %v254
    %v256 = vtanh.pop %v242
    %v257 = vtanh.pop %v243
    %v260 = vrot.slane %v255, 7
    %vm261 = vcmask 1041409
    %v262 = vsel %vm261, %v260, %v253
    %v266 = vrot.slane %v257, 7
    %v267 = vsel %vm261, %v266, %v256
    %v269 = vsel %vm181, %v262, %v267
    %v270 = vmul.f32 %v269, 0.0
    %272 = vrot.lane.b32.xlu0 %v269, 32
    %v273 = vpop.permute.xlu0 %272
    %v275 = vmul.f32 %v269, %v273
    %277 = vrot.lane.b32.xlu0 %v275, 32
    %v278 = vpop.permute.xlu0 %277
    %v280 = vadd.f32 %v270, %v278
    %v281 = vtanh.pop %v280
    %283 = vrot.lane.b32.xlu0 %v281, 32
    %v284 = vpop.permute.xlu0 %283
    %v286 = vmul.f32 %v269, %v284
    %v287 = vpack.c.bf16 %v286, %v286
    %289 = vrot.lane.b32.xlu0 %v287, 64
    %v290 = vpop.permute.xlu0 %289
    %v295 = vunpack.c.l.b16 %v164
    %v296 = vunpack.c.l.b16 %v165
    %v297 = vunpack.c.l.b16 %v166
    %v298 = vunpack.c.l.b16 %v167
    %v299 = vpack.c.b16 %v296, %v295
    %v300 = vpack.c.b16 %v298, %v297
    %v304 = vsel %vm194, %v290, 0
    %306 = vmatprep.subr.bf16.mxu0 0
    %307 = vmatpush1.bf16.msra.mxu0 %v299
    %308 = vmatprep.subr.bf16.mxu0 0
    %309 = vmatpush1.bf16.msra.mxu0 %v300
    %310 = vmatprep.subr.bf16.mxu0 0
    %311 = vmatpush1.bf16.msra.mxu0 0
    %312 = vmatprep.subr.bf16.mxu0 0
    %313 = vmatpush1.bf16.msra.mxu0 0
    %314 = vmatprep.subr.bf16.mxu0 0
    %315 = vmatpush1.bf16.msra.mxu0 0
    %316 = vmatprep.subr.bf16.mxu0 0
    %317 = vmatpush1.bf16.msra.mxu0 0
    %318 = vmatprep.subr.bf16.mxu0 0
    %319 = vmatpush1.bf16.msra.mxu0 0
    %320 = vmatprep.subr.bf16.mxu0 0
    %321 = vmatpush1.bf16.msra.mxu0 0
    %322 = vmatprep.subr.bf16.mxu0 0
    %323 = vmatpush1.bf16.msra.mxu0 0
    %324 = vmatprep.subr.bf16.mxu0 0
    %325 = vmatpush1.bf16.msra.mxu0 0
    %326 = vmatprep.subr.bf16.mxu0 0
    %327 = vmatpush1.bf16.msra.mxu0 0
    %328 = vmatprep.subr.bf16.mxu0 0
    %329 = vmatpush1.bf16.msra.mxu0 0
    %330 = vmatprep.subr.bf16.mxu0 0
    %331 = vmatpush1.bf16.msra.mxu0 0
    %332 = vmatprep.subr.bf16.mxu0 0
    %333 = vmatpush1.bf16.msra.mxu0 0
    %334 = vmatprep.subr.bf16.mxu0 0
    %335 = vmatpush1.bf16.msra.mxu0 0
    %336 = vmatprep.subr.bf16.mxu0 0
    %337 = vmatpush1.bf16.msra.mxu0 0
    %338 = vmatprep.mubr.bf16.mxu0 0
    %339 = vmatmul.mubr.bf16.gmra.mrb[0].mxu0 %v304
    %v340 = vpop.f32.mrb[0].mxu0
    %v341 = vadd.f32 %v177, %v340
    %v342 = vpop.f32.mrb[0].mxu0
    %v343 = vpop.f32.mrb[0].mxu0
    %v344 = vpop.f32.mrb[0].mxu0
    %345 = vdwg.mxu0
    %v350 = vunpack.c.l.b16 %v168
    %v351 = vunpack.c.l.b16 %v169
    %v352 = vunpack.c.l.b16 %v170
    %v353 = vunpack.c.l.b16 %v171
    %v354 = vpack.c.b16 %v351, %v350
    %v355 = vpack.c.b16 %v353, %v352
    %358 = vmatprep.subr.bf16.mxu0 0
    %359 = vmatpush1.bf16.msra.mxu0 %v354
    %360 = vmatprep.subr.bf16.mxu0 0
    %361 = vmatpush1.bf16.msra.mxu0 %v355
    %362 = vmatprep.subr.bf16.mxu0 0
    %363 = vmatpush1.bf16.msra.mxu0 0
    %364 = vmatprep.subr.bf16.mxu0 0
    %365 = vmatpush1.bf16.msra.mxu0 0
    %366 = vmatprep.subr.bf16.mxu0 0
    %367 = vmatpush1.bf16.msra.mxu0 0
    %368 = vmatprep.subr.bf16.mxu0 0
    %369 = vmatpush1.bf16.msra.mxu0 0
    %370 = vmatprep.subr.bf16.mxu0 0
    %371 = vmatpush1.bf16.msra.mxu0 0
    %372 = vmatprep.subr.bf16.mxu0 0
    %373 = vmatpush1.bf16.msra.mxu0 0
    %374 = vmatprep.subr.bf16.mxu0 0
    %375 = vmatpush1.bf16.msra.mxu0 0
    %376 = vmatprep.subr.bf16.mxu0 0
    %377 = vmatpush1.bf16.msra.mxu0 0
    %378 = vmatprep.subr.bf16.mxu0 0
    %379 = vmatpush1.bf16.msra.mxu0 0
    %380 = vmatprep.subr.bf16.mxu0 0
    %381 = vmatpush1.bf16.msra.mxu0 0
    %382 = vmatprep.subr.bf16.mxu0 0
    %383 = vmatpush1.bf16.msra.mxu0 0
    %384 = vmatprep.subr.bf16.mxu0 0
    %385 = vmatpush1.bf16.msra.mxu0 0
    %386 = vmatprep.subr.bf16.mxu0 0
    %387 = vmatpush1.bf16.msra.mxu0 0
    %388 = vmatprep.subr.bf16.mxu0 0
    %389 = vmatpush1.bf16.msra.mxu0 0
    %390 = vmatprep.mubr.bf16.mxu0 0
    %391 = vmatmul.mubr.bf16.gmra.mrb[0].mxu0 %v196
    %v392 = vpop.f32.mrb[0].mxu0
    %v393 = vadd.f32 0.0, %v392
    %v394 = vpop.f32.mrb[0].mxu0
    %v395 = vpop.f32.mrb[0].mxu0
    %v396 = vpop.f32.mrb[0].mxu0
    %397 = vdwg.mxu0
    %v398 = vadd.f32 %v341, %v393
    %v399 = vxor.u32 %v398, 2147483648
    %v400 = vmul.f32 %v399, 1.442695
    %v401 = vpow.pop %v400
    %v402 = vadd.f32 %v401, 1.0
    %v403 = vrcp.pop %v402
    %v404 = vmul.f32 1.0, %v403
    %v405 = vtanh.pop %v398
    %v406 = vsel %vm181, %v404, %v405
    %v407 = vmul.f32 %v406, 0.0
    %409 = vrot.lane.b32.xlu0 %v406, 32
    %v410 = vpop.permute.xlu0 %409
    %v412 = vmul.f32 %v406, %v410
    %414 = vrot.lane.b32.xlu0 %v412, 32
    %v415 = vpop.permute.xlu0 %414
    %v417 = vadd.f32 %v407, %v415
    %v418 = vtanh.pop %v417
    %420 = vrot.lane.b32.xlu0 %v418, 32
    %v421 = vpop.permute.xlu0 %420
    %v423 = vmul.f32 %v406, %v421
    %v426 = vunpack.c.l.s4 1966171168
    %v427 = vunpack.c.0.s8 %v426
    %v428 = vlaneseq
    %v429 = vshrl.u32 %v428, 7
    %v430 = vsub.s32 %v427, %v429
    %v431 = vrot.slane %v423, %v430
    %v432 = vcombine.high %v431, %v431
    %v434 = vunpack.c.l.s4 1966171168
    %v435 = vunpack.c.0.s8 %v434
    %v436 = vlaneseq
    %v437 = vshrl.u32 %v436, 7
    %v438 = vsub.s32 %v435, %v437
    %v439 = vrot.slane %v431, %v438
    %v441 = vunpack.c.l.s4 1966171168
    %v442 = vunpack.c.0.s8 %v441
    %v443 = vlaneseq
    %v444 = vshrl.u32 %v443, 7
    %v445 = vsub.s32 %v442, %v444
    %v446 = vrot.slane %v432, %v445
    %v447 = vlaneseq
    %v448 = vshrl.u32 %v447, 7
    %v449 = vsub.s32 0, %v448
    %v450 = vrot.slane %v439, %v449
    %v451 = vlaneseq
    %v452 = vshrl.u32 %v451, 7
    %v453 = vsub.s32 0, %v452
    %v454 = vrot.slane %v446, %v453
    %455 = vrot.lane.b32.xlu0 %v450, 64
    %v456 = vpop.permute.xlu0 %455
    %457 = vrot.lane.b32.xlu0 %v454, 64
    %v458 = vpop.permute.xlu0 %457
    %vm461 = vcmask 253952
    %462 = vst.msk [vmem:[#allocation2] sm:$0x1] %vm461, %v456
    %463 = vst.msk [vmem:[#allocation2 + $0x8] sm:$0x1] %vm461, %v458
    %464 = vmatprep.subr.bf16.mxu0 0
    %465 = vmatpush1.bf16.msra.mxu0 %v190
    %466 = vmatprep.subr.bf16.mxu0 0
    %467 = vmatpush1.bf16.msra.mxu0 %v191
    %468 = vmatprep.subr.bf16.mxu0 0
    %469 = vmatpush1.bf16.msra.mxu0 0
    %470 = vmatprep.subr.bf16.mxu0 0
    %471 = vmatpush1.bf16.msra.mxu0 0
    %472 = vmatprep.subr.bf16.mxu0 0
    %473 = vmatpush1.bf16.msra.mxu0 0
    %474 = vmatprep.subr.bf16.mxu0 0
    %475 = vmatpush1.bf16.msra.mxu0 0
    %476 = vmatprep.subr.bf16.mxu0 0
    %477 = vmatpush1.bf16.msra.mxu0 0
    %478 = vmatprep.subr.bf16.mxu0 0
    %479 = vmatpush1.bf16.msra.mxu0 0
    %480 = vmatprep.subr.bf16.mxu0 0
    %481 = vmatpush1.bf16.msra.mxu0 0
    %482 = vmatprep.subr.bf16.mxu0 0
    %483 = vmatpush1.bf16.msra.mxu0 0
    %484 = vmatprep.subr.bf16.mxu0 0
    %485 = vmatpush1.bf16.msra.mxu0 0
    %486 = vmatprep.subr.bf16.mxu0 0
    %487 = vmatpush1.bf16.msra.mxu0 0
    %488 = vmatprep.subr.bf16.mxu0 0
    %489 = vmatpush1.bf16.msra.mxu0 0
    %490 = vmatprep.subr.bf16.mxu0 0
    %491 = vmatpush1.bf16.msra.mxu0 0
    %492 = vmatprep.subr.bf16.mxu0 0
    %493 = vmatpush1.bf16.msra.mxu0 0
    %494 = vmatprep.subr.bf16.mxu0 0
    %495 = vmatpush1.bf16.msra.mxu0 0
    %496 = vmatprep.mubr.bf16.mxu0 0
    %497 = vmatmul.mubr.bf16.gmra.mrb[0].mxu0 %v304
    %v498 = vpop.f32.mrb[0].mxu0
    %v499 = vadd.f32 0.0, %v498
    %v500 = vpop.f32.mrb[0].mxu0
    %v501 = vpop.f32.mrb[0].mxu0
    %v502 = vpop.f32.mrb[0].mxu0
    %503 = vdwg.mxu0
    %v505 = vrot.slane %v499, 7
    %v508 = vadd.f32 %v154, %v505
    %v509 = vadd.f32 %v157, %v499
    %v510 = vxor.u32 %v508, 2147483648
    %v511 = vxor.u32 %v509, 2147483648
    %v512 = vmul.f32 %v510, 1.442695
    %v513 = vpow.pop %v512
    %v514 = vmul.f32 %v511, 1.442695
    %v515 = vpow.pop %v514
    %v516 = vadd.f32 %v513, 1.0
    %v517 = vadd.f32 %v515, 1.0
    %v518 = vrcp.pop %v516
    %v519 = vmul.f32 1.0, %v518
    %v520 = vrcp.pop %v517
    %v521 = vmul.f32 1.0, %v520
    %v522 = vtanh.pop %v508
    %v523 = vtanh.pop %v509
    %v526 = vrot.slane %v519, 1
    %v527 = vsel %vm261, %v521, %v526
    %v531 = vrot.slane %v522, 1
    %v532 = vsel %vm261, %v523, %v531
    %v534 = vsel %vm181, %v527, %v532
    %v535 = vmul.f32 %v534, %v280
    %537 = vrot.lane.b32.xlu0 %v534, 32
    %v538 = vpop.permute.xlu0 %537
    %v540 = vmul.f32 %v534, %v538
    %542 = vrot.lane.b32.xlu0 %v540, 32
    %v543 = vpop.permute.xlu0 %542
    %v545 = vadd.f32 %v535, %v543
    %v546 = vtanh.pop %v545
    %548 = vrot.lane.b32.xlu0 %v546, 32
    %v549 = vpop.permute.xlu0 %548
    %v551 = vmul.f32 %v534, %v549
    %v552 = vpack.c.bf16 %v551, %v551
    %554 = vrot.lane.b32.xlu0 %v552, 64
    %v555 = vpop.permute.xlu0 %554
    %v557 = vsel %vm194, %v555, 0
    %559 = vmatprep.subr.bf16.mxu0 0
    %560 = vmatpush1.bf16.msra.mxu0 %v299
    %561 = vmatprep.subr.bf16.mxu0 0
    %562 = vmatpush1.bf16.msra.mxu0 %v300
    %563 = vmatprep.subr.bf16.mxu0 0
    %564 = vmatpush1.bf16.msra.mxu0 0
    %565 = vmatprep.subr.bf16.mxu0 0
    %566 = vmatpush1.bf16.msra.mxu0 0
    %567 = vmatprep.subr.bf16.mxu0 0
    %568 = vmatpush1.bf16.msra.mxu0 0
    %569 = vmatprep.subr.bf16.mxu0 0
    %570 = vmatpush1.bf16.msra.mxu0 0
    %571 = vmatprep.subr.bf16.mxu0 0
    %572 = vmatpush1.bf16.msra.mxu0 0
    %573 = vmatprep.subr.bf16.mxu0 0
    %574 = vmatpush1.bf16.msra.mxu0 0
    %575 = vmatprep.subr.bf16.mxu0 0
    %576 = vmatpush1.bf16.msra.mxu0 0
    %577 = vmatprep.subr.bf16.mxu0 0
    %578 = vmatpush1.bf16.msra.mxu0 0
    %579 = vmatprep.subr.bf16.mxu0 0
    %580 = vmatpush1.bf16.msra.mxu0 0
    %581 = vmatprep.subr.bf16.mxu0 0
    %582 = vmatpush1.bf16.msra.mxu0 0
    %583 = vmatprep.subr.bf16.mxu0 0
    %584 = vmatpush1.bf16.msra.mxu0 0
    %585 = vmatprep.subr.bf16.mxu0 0
    %586 = vmatpush1.bf16.msra.mxu0 0
    %587 = vmatprep.subr.bf16.mxu0 0
    %588 = vmatpush1.bf16.msra.mxu0 0
    %589 = vmatprep.subr.bf16.mxu0 0
    %590 = vmatpush1.bf16.msra.mxu0 0
    %591 = vmatprep.mubr.bf16.mxu0 0
    %592 = vmatmul.mubr.bf16.gmra.mrb[0].mxu0 %v557
    %v593 = vpop.f32.mrb[0].mxu0
    %v594 = vadd.f32 %v177, %v593
    %v595 = vpop.f32.mrb[0].mxu0
    %v596 = vpop.f32.mrb[0].mxu0
    %v597 = vpop.f32.mrb[0].mxu0
    %598 = vdwg.mxu0
    %v599 = vpack.c.bf16 %v423, %v423
    %601 = vrot.lane.b32.xlu0 %v599, 64
    %v602 = vpop.permute.xlu0 %601
    %v604 = vsel %vm194, %v602, 0
    %606 = vmatprep.subr.bf16.mxu0 0
    %607 = vmatpush1.bf16.msra.mxu0 %v354
    %608 = vmatprep.subr.bf16.mxu0 0
    %609 = vmatpush1.bf16.msra.mxu0 %v355
    %610 = vmatprep.subr.bf16.mxu0 0
    %611 = vmatpush1.bf16.msra.mxu0 0
    %612 = vmatprep.subr.bf16.mxu0 0
    %613 = vmatpush1.bf16.msra.mxu0 0
    %614 = vmatprep.subr.bf16.mxu0 0
    %615 = vmatpush1.bf16.msra.mxu0 0
    %616 = vmatprep.subr.bf16.mxu0 0
    %617 = vmatpush1.bf16.msra.mxu0 0
    %618 = vmatprep.subr.bf16.mxu0 0
    %619 = vmatpush1.bf16.msra.mxu0 0
    %620 = vmatprep.subr.bf16.mxu0 0
    %621 = vmatpush1.bf16.msra.mxu0 0
    %622 = vmatprep.subr.bf16.mxu0 0
    %623 = vmatpush1.bf16.msra.mxu0 0
    %624 = vmatprep.subr.bf16.mxu0 0
    %625 = vmatpush1.bf16.msra.mxu0 0
    %626 = vmatprep.subr.bf16.mxu0 0
    %627 = vmatpush1.bf16.msra.mxu0 0
    %628 = vmatprep.subr.bf16.mxu0 0
    %629 = vmatpush1.bf16.msra.mxu0 0
    %630 = vmatprep.subr.bf16.mxu0 0
    %631 = vmatpush1.bf16.msra.mxu0 0
    %632 = vmatprep.subr.bf16.mxu0 0
    %633 = vmatpush1.bf16.msra.mxu0 0
    %634 = vmatprep.subr.bf16.mxu0 0
    %635 = vmatpush1.bf16.msra.mxu0 0
    %636 = vmatprep.subr.bf16.mxu0 0
    %637 = vmatpush1.bf16.msra.mxu0 0
    %638 = vmatprep.mubr.bf16.mxu0 0
    %639 = vmatmul.mubr.bf16.gmra.mrb[0].mxu0 %v604
    %v640 = vpop.f32.mrb[0].mxu0
    %v641 = vadd.f32 0.0, %v640
    %v642 = vpop.f32.mrb[0].mxu0
    %v643 = vpop.f32.mrb[0].mxu0
    %v644 = vpop.f32.mrb[0].mxu0
    %645 = vdwg.mxu0
    %v646 = vadd.f32 %v594, %v641
    %v647 = vxor.u32 %v646, 2147483648
    %v648 = vmul.f32 %v647, 1.442695
    %v649 = vpow.pop %v648
    %v650 = vadd.f32 %v649, 1.0
    %v651 = vrcp.pop %v650
    %v652 = vmul.f32 1.0, %v651
    %v653 = vtanh.pop %v646
    %v654 = vsel %vm181, %v652, %v653
    %v655 = vmul.f32 %v654, %v417
    %657 = vrot.lane.b32.xlu0 %v654, 32
    %v658 = vpop.permute.xlu0 %657
    %v660 = vmul.f32 %v654, %v658
    %662 = vrot.lane.b32.xlu0 %v660, 32
    %v663 = vpop.permute.xlu0 %662
    %v665 = vadd.f32 %v655, %v663
    %v666 = vtanh.pop %v665
    %668 = vrot.lane.b32.xlu0 %v666, 32
    %v669 = vpop.permute.xlu0 %668
    %v671 = vmul.f32 %v654, %v669
    %v674 = vunpack.c.l.s4 1966171168
    %v675 = vunpack.c.0.s8 %v674
    %v676 = vlaneseq
    %v677 = vshrl.u32 %v676, 7
    %v678 = vsub.s32 %v675, %v677
    %v679 = vrot.slane %v671, %v678
    %v680 = vcombine.high %v679, %v679
    %v682 = vunpack.c.l.s4 1966171168
    %v683 = vunpack.c.0.s8 %v682
    %v684 = vlaneseq
    %v685 = vshrl.u32 %v684, 7
    %v686 = vsub.s32 %v683, %v685
    %v687 = vrot.slane %v679, %v686
    %v689 = vunpack.c.l.s4 1966171168
    %v690 = vunpack.c.0.s8 %v689
    %v691 = vlaneseq
    %v692 = vshrl.u32 %v691, 7
    %v693 = vsub.s32 %v690, %v692
    %v694 = vrot.slane %v680, %v693
    %v695 = vlaneseq
    %v696 = vshrl.u32 %v695, 7
    %v697 = vsub.s32 0, %v696
    %v698 = vrot.slane %v687, %v697
    %v699 = vlaneseq
    %v700 = vshrl.u32 %v699, 7
    %v701 = vsub.s32 0, %v700
    %v702 = vrot.slane %v694, %v701
    %703 = vrot.lane.b32.xlu0 %v698, 64
    %v704 = vpop.permute.xlu0 %703
    %705 = vrot.lane.b32.xlu0 %v702, 64
    %v706 = vpop.permute.xlu0 %705
    %709 = vst.msk [vmem:[#allocation2 + $0x1] sm:$0x1] %vm461, %v704
    %710 = vst.msk [vmem:[#allocation2 + $0x9] sm:$0x1] %vm461, %v706
    %711 = vmatprep.subr.bf16.mxu0 0
    %712 = vmatpush1.bf16.msra.mxu0 %v190
    %713 = vmatprep.subr.bf16.mxu0 0
    %714 = vmatpush1.bf16.msra.mxu0 %v191
    %715 = vmatprep.subr.bf16.mxu0 0
    %716 = vmatpush1.bf16.msra.mxu0 0
    %717 = vmatprep.subr.bf16.mxu0 0
    %718 = vmatpush1.bf16.msra.mxu0 0
    %719 = vmatprep.subr.bf16.mxu0 0
    %720 = vmatpush1.bf16.msra.mxu0 0
    %721 = vmatprep.subr.bf16.mxu0 0
    %722 = vmatpush1.bf16.msra.mxu0 0
    %723 = vmatprep.subr.bf16.mxu0 0
    %724 = vmatpush1.bf16.msra.mxu0 0
    %725 = vmatprep.subr.bf16.mxu0 0
    %726 = vmatpush1.bf16.msra.mxu0 0
    %727 = vmatprep.subr.bf16.mxu0 0
    %728 = vmatpush1.bf16.msra.mxu0 0
    %729 = vmatprep.subr.bf16.mxu0 0
    %730 = vmatpush1.bf16.msra.mxu0 0
    %731 = vmatprep.subr.bf16.mxu0 0
    %732 = vmatpush1.bf16.msra.mxu0 0
    %733 = vmatprep.subr.bf16.mxu0 0
    %734 = vmatpush1.bf16.msra.mxu0 0
    %735 = vmatprep.subr.bf16.mxu0 0
    %736 = vmatpush1.bf16.msra.mxu0 0
    %737 = vmatprep.subr.bf16.mxu0 0
    %738 = vmatpush1.bf16.msra.mxu0 0
    %739 = vmatprep.subr.bf16.mxu0 0
    %740 = vmatpush1.bf16.msra.mxu0 0
    %741 = vmatprep.subr.bf16.mxu0 0
    %742 = vmatpush1.bf16.msra.mxu0 0
    %743 = vmatprep.mubr.bf16.mxu0 0
    %744 = vmatmul.mubr.bf16.gmra.mrb[0].mxu0 %v557
    %v745 = vpop.f32.mrb[0].mxu0
    %v746 = vadd.f32 0.0, %v745
    %v747 = vpop.f32.mrb[0].mxu0
    %v748 = vpop.f32.mrb[0].mxu0
    %v749 = vpop.f32.mrb[0].mxu0
    %750 = vdwg.mxu0
    %v752 = vrot.slane %v746, 6
    %v753 = vrot.slane %v746, 7
    %v756 = vadd.f32 %v154, %v752
    %v757 = vadd.f32 %v157, %v753
    %v758 = vxor.u32 %v756, 2147483648
    %v759 = vxor.u32 %v757, 2147483648
    %v760 = vmul.f32 %v758, 1.442695
    %v761 = vpow.pop %v760
    %v762 = vmul.f32 %v759, 1.442695
    %v763 = vpow.pop %v762
    %v764 = vadd.f32 %v761, 1.0
    %v765 = vadd.f32 %v763, 1.0
    %v766 = vrcp.pop %v764
    %v767 = vmul.f32 1.0, %v766
    %v768 = vrcp.pop %v765
    %v769 = vmul.f32 1.0, %v768
    %v770 = vtanh.pop %v756
    %v771 = vtanh.pop %v757
    %v774 = vrot.slane %v767, 2
    %v775 = vrot.slane %v769, 1
    %v776 = vsel %vm261, %v775, %v774
    %v780 = vrot.slane %v770, 2
    %v781 = vrot.slane %v771, 1
    %v782 = vsel %vm261, %v781, %v780
    %v784 = vsel %vm181, %v776, %v782
    %v785 = vmul.f32 %v784, %v545
    %787 = vrot.lane.b32.xlu0 %v784, 32
    %v788 = vpop.permute.xlu0 %787
    %v790 = vmul.f32 %v784, %v788
    %792 = vrot.lane.b32.xlu0 %v790, 32
    %v793 = vpop.permute.xlu0 %792
    %v795 = vadd.f32 %v785, %v793
    %v796 = vtanh.pop %v795
    %798 = vrot.lane.b32.xlu0 %v796, 32
    %v799 = vpop.permute.xlu0 %798
    %v801 = vmul.f32 %v784, %v799
    %v802 = vpack.c.bf16 %v801, %v801
    %804 = vrot.lane.b32.xlu0 %v802, 64
    %v805 = vpop.permute.xlu0 %804
    %v807 = vsel %vm194, %v805, 0
    %809 = vmatprep.subr.bf16.mxu0 0
    %810 = vmatpush1.bf16.msra.mxu0 %v299
    %811 = vmatprep.subr.bf16.mxu0 0
    %812 = vmatpush1.bf16.msra.mxu0 %v300
    %813 = vmatprep.subr.bf16.mxu0 0
    %814 = vmatpush1.bf16.msra.mxu0 0
    %815 = vmatprep.subr.bf16.mxu0 0
    %816 = vmatpush1.bf16.msra.mxu0 0
    %817 = vmatprep.subr.bf16.mxu0 0
    %818 = vmatpush1.bf16.msra.mxu0 0
    %819 = vmatprep.subr.bf16.mxu0 0
    %820 = vmatpush1.bf16.msra.mxu0 0
    %821 = vmatprep.subr.bf16.mxu0 0
    %822 = vmatpush1.bf16.msra.mxu0 0
    %823 = vmatprep.subr.bf16.mxu0 0
    %824 = vmatpush1.bf16.msra.mxu0 0
    %825 = vmatprep.subr.bf16.mxu0 0
    %826 = vmatpush1.bf16.msra.mxu0 0
    %827 = vmatprep.subr.bf16.mxu0 0
    %828 = vmatpush1.bf16.msra.mxu0 0
    %829 = vmatprep.subr.bf16.mxu0 0
    %830 = vmatpush1.bf16.msra.mxu0 0
    %831 = vmatprep.subr.bf16.mxu0 0
    %832 = vmatpush1.bf16.msra.mxu0 0
    %833 = vmatprep.subr.bf16.mxu0 0
    %834 = vmatpush1.bf16.msra.mxu0 0
    %835 = vmatprep.subr.bf16.mxu0 0
    %836 = vmatpush1.bf16.msra.mxu0 0
    %837 = vmatprep.subr.bf16.mxu0 0
    %838 = vmatpush1.bf16.msra.mxu0 0
    %839 = vmatprep.subr.bf16.mxu0 0
    %840 = vmatpush1.bf16.msra.mxu0 0
    %841 = vmatprep.mubr.bf16.mxu0 0
    %842 = vmatmul.mubr.bf16.gmra.mrb[0].mxu0 %v807
    %v843 = vpop.f32.mrb[0].mxu0
    %v844 = vadd.f32 %v177, %v843
    %v845 = vpop.f32.mrb[0].mxu0
    %v846 = vpop.f32.mrb[0].mxu0
    %v847 = vpop.f32.mrb[0].mxu0
    %848 = vdwg.mxu0
    %v849 = vpack.c.bf16 %v671, %v671
    %851 = vrot.lane.b32.xlu0 %v849, 64
    %v852 = vpop.permute.xlu0 %851
    %v854 = vsel %vm194, %v852, 0
    %856 = vmatprep.subr.bf16.mxu0 0
    %857 = vmatpush1.bf16.msra.mxu0 %v354
    %858 = vmatprep.subr.bf16.mxu0 0
    %859 = vmatpush1.bf16.msra.mxu0 %v355
    %860 = vmatprep.subr.bf16.mxu0 0
    %861 = vmatpush1.bf16.msra.mxu0 0
    %862 = vmatprep.subr.bf16.mxu0 0
    %863 = vmatpush1.bf16.msra.mxu0 0
    %864 = vmatprep.subr.bf16.mxu0 0
    %865 = vmatpush1.bf16.msra.mxu0 0
    %866 = vmatprep.subr.bf16.mxu0 0
    %867 = vmatpush1.bf16.msra.mxu0 0
    %868 = vmatprep.subr.bf16.mxu0 0
    %869 = vmatpush1.bf16.msra.mxu0 0
    %870 = vmatprep.subr.bf16.mxu0 0
    %871 = vmatpush1.bf16.msra.mxu0 0
    %872 = vmatprep.subr.bf16.mxu0 0
    %873 = vmatpush1.bf16.msra.mxu0 0
    %874 = vmatprep.subr.bf16.mxu0 0
    %875 = vmatpush1.bf16.msra.mxu0 0
    %876 = vmatprep.subr.bf16.mxu0 0
    %877 = vmatpush1.bf16.msra.mxu0 0
    %878 = vmatprep.subr.bf16.mxu0 0
    %879 = vmatpush1.bf16.msra.mxu0 0
    %880 = vmatprep.subr.bf16.mxu0 0
    %881 = vmatpush1.bf16.msra.mxu0 0
    %882 = vmatprep.subr.bf16.mxu0 0
    %883 = vmatpush1.bf16.msra.mxu0 0
    %884 = vmatprep.subr.bf16.mxu0 0
    %885 = vmatpush1.bf16.msra.mxu0 0
    %886 = vmatprep.subr.bf16.mxu0 0
    %887 = vmatpush1.bf16.msra.mxu0 0
    %888 = vmatprep.mubr.bf16.mxu0 0
    %889 = vmatmul.mubr.bf16.gmra.mrb[0].mxu0 %v854
    %v890 = vpop.f32.mrb[0].mxu0
    %v891 = vadd.f32 0.0, %v890
    %v892 = vpop.f32.mrb[0].mxu0
    %v893 = vpop.f32.mrb[0].mxu0
    %v894 = vpop.f32.mrb[0].mxu0
    %895 = vdwg.mxu0
    %v896 = vadd.f32 %v844, %v891
    %v897 = vxor.u32 %v896, 2147483648
    %v898 = vmul.f32 %v897, 1.442695
    %v899 = vpow.pop %v898
    %v900 = vadd.f32 %v899, 1.0
    %v901 = vrcp.pop %v900
    %v902 = vmul.f32 1.0, %v901
    %v903 = vtanh.pop %v896
    %v904 = vsel %vm181, %v902, %v903
    %v905 = vmul.f32 %v904, %v665
    %907 = vrot.lane.b32.xlu0 %v904, 32
    %v908 = vpop.permute.xlu0 %907
    %v910 = vmul.f32 %v904, %v908
    %912 = vrot.lane.b32.xlu0 %v910, 32
    %v913 = vpop.permute.xlu0 %912
    %v915 = vadd.f32 %v905, %v913
    %v916 = vtanh.pop %v915
    %918 = vrot.lane.b32.xlu0 %v916, 32
    %v919 = vpop.permute.xlu0 %918
    %v921 = vmul.f32 %v904, %v919
    %v924 = vunpack.c.l.s4 1966171168
    %v925 = vunpack.c.0.s8 %v924
    %v926 = vlaneseq
    %v927 = vshrl.u32 %v926, 7
    %v928 = vsub.s32 %v925, %v927
    %v929 = vrot.slane %v921, %v928
    %v930 = vcombine.high %v929, %v929
    %v932 = vunpack.c.l.s4 1966171168
    %v933 = vunpack.c.0.s8 %v932
    %v934 = vlaneseq
    %v935 = vshrl.u32 %v934, 7
    %v936 = vsub.s32 %v933, %v935
    %v937 = vrot.slane %v929, %v936
    %v939 = vunpack.c.l.s4 1966171168
    %v940 = vunpack.c.0.s8 %v939
    %v941 = vlaneseq
    %v942 = vshrl.u32 %v941, 7
    %v943 = vsub.s32 %v940, %v942
    %v944 = vrot.slane %v930, %v943
    %v945 = vlaneseq
    %v946 = vshrl.u32 %v945, 7
    %v947 = vsub.s32 0, %v946
    %v948 = vrot.slane %v937, %v947
    %v949 = vlaneseq
    %v950 = vshrl.u32 %v949, 7
    %v951 = vsub.s32 0, %v950
    %v952 = vrot.slane %v944, %v951
    %953 = vrot.lane.b32.xlu0 %v948, 64
    %v954 = vpop.permute.xlu0 %953
    %955 = vrot.lane.b32.xlu0 %v952, 64
    %v956 = vpop.permute.xlu0 %955
    %959 = vst.msk [vmem:[#allocation2 + $0x2] sm:$0x1] %vm461, %v954
    %960 = vst.msk [vmem:[#allocation2 + $0xa] sm:$0x1] %vm461, %v956
    %961 = vmatprep.subr.bf16.mxu0 0
    %962 = vmatpush1.bf16.msra.mxu0 %v190
    %963 = vmatprep.subr.bf16.mxu0 0
    %964 = vmatpush1.bf16.msra.mxu0 %v191
    %965 = vmatprep.subr.bf16.mxu0 0
    %966 = vmatpush1.bf16.msra.mxu0 0
    %967 = vmatprep.subr.bf16.mxu0 0
    %968 = vmatpush1.bf16.msra.mxu0 0
    %969 = vmatprep.subr.bf16.mxu0 0
    %970 = vmatpush1.bf16.msra.mxu0 0
    %971 = vmatprep.subr.bf16.mxu0 0
    %972 = vmatpush1.bf16.msra.mxu0 0
    %973 = vmatprep.subr.bf16.mxu0 0
    %974 = vmatpush1.bf16.msra.mxu0 0
    %975 = vmatprep.subr.bf16.mxu0 0
    %976 = vmatpush1.bf16.msra.mxu0 0
    %977 = vmatprep.subr.bf16.mxu0 0
    %978 = vmatpush1.bf16.msra.mxu0 0
    %979 = vmatprep.subr.bf16.mxu0 0
    %980 = vmatpush1.bf16.msra.mxu0 0
    %981 = vmatprep.subr.bf16.mxu0 0
    %982 = vmatpush1.bf16.msra.mxu0 0
    %983 = vmatprep.subr.bf16.mxu0 0
    %984 = vmatpush1.bf16.msra.mxu0 0
    %985 = vmatprep.subr.bf16.mxu0 0
    %986 = vmatpush1.bf16.msra.mxu0 0
    %987 = vmatprep.subr.bf16.mxu0 0
    %988 = vmatpush1.bf16.msra.mxu0 0
    %989 = vmatprep.subr.bf16.mxu0 0
    %990 = vmatpush1.bf16.msra.mxu0 0
    %991 = vmatprep.subr.bf16.mxu0 0
    %992 = vmatpush1.bf16.msra.mxu0 0
    %993 = vmatprep.mubr.bf16.mxu0 0
    %994 = vmatmul.mubr.bf16.gmra.mrb[0].mxu0 %v807
    %v995 = vpop.f32.mrb[0].mxu0
    %v996 = vadd.f32 0.0, %v995
    %v997 = vpop.f32.mrb[0].mxu0
    %v998 = vpop.f32.mrb[0].mxu0
    %v999 = vpop.f32.mrb[0].mxu0
    %1000 = vdwg.mxu0
    %v1002 = vrot.slane %v996, 5
    %v1003 = vrot.slane %v996, 6
    %v1006 = vadd.f32 %v154, %v1002
    %v1007 = vadd.f32 %v157, %v1003
    %v1008 = vxor.u32 %v1006, 2147483648
    %v1009 = vxor.u32 %v1007, 2147483648
    %v1010 = vmul.f32 %v1008, 1.442695
    %v1011 = vpow.pop %v1010
    %v1012 = vmul.f32 %v1009, 1.442695
    %v1013 = vpow.pop %v1012
    %v1014 = vadd.f32 %v1011, 1.0
    %v1015 = vadd.f32 %v1013, 1.0
    %v1016 = vrcp.pop %v1014
    %v1017 = vmul.f32 1.0, %v1016
    %v1018 = vrcp.pop %v1015
    %v1019 = vmul.f32 1.0, %v1018
    %v1020 = vtanh.pop %v1006
    %v1021 = vtanh.pop %v1007
    %v1024 = vrot.slane %v1017, 3
    %v1025 = vrot.slane %v1019, 2
    %v1026 = vsel %vm261, %v1025, %v1024
    %v1030 = vrot.slane %v1020, 3
    %v1031 = vrot.slane %v1021, 2
    %v1032 = vsel %vm261, %v1031, %v1030
    %v1034 = vsel %vm181, %v1026, %v1032
    %v1035 = vmul.f32 %v1034, %v795
    %1037 = vrot.lane.b32.xlu0 %v1034, 32
    %v1038 = vpop.permute.xlu0 %1037
    %v1040 = vmul.f32 %v1034, %v1038
    %1042 = vrot.lane.b32.xlu0 %v1040, 32
    %v1043 = vpop.permute.xlu0 %1042
    %v1045 = vadd.f32 %v1035, %v1043
    %v1046 = vtanh.pop %v1045
    %1048 = vrot.lane.b32.xlu0 %v1046, 32
    %v1049 = vpop.permute.xlu0 %1048
    %v1051 = vmul.f32 %v1034, %v1049
    %v1052 = vpack.c.bf16 %v1051, %v1051
    %1054 = vrot.lane.b32.xlu0 %v1052, 64
    %v1055 = vpop.permute.xlu0 %1054
    %v1057 = vsel %vm194, %v1055, 0
    %1059 = vmatprep.subr.bf16.mxu0 0
    %1060 = vmatpush1.bf16.msra.mxu0 %v299
    %1061 = vmatprep.subr.bf16.mxu0 0
    %1062 = vmatpush1.bf16.msra.mxu0 %v300
    %1063 = vmatprep.subr.bf16.mxu0 0
    %1064 = vmatpush1.bf16.msra.mxu0 0
    %1065 = vmatprep.subr.bf16.mxu0 0
    %1066 = vmatpush1.bf16.msra.mxu0 0
    %1067 = vmatprep.subr.bf16.mxu0 0
    %1068 = vmatpush1.bf16.msra.mxu0 0
    %1069 = vmatprep.subr.bf16.mxu0 0
    %1070 = vmatpush1.bf16.msra.mxu0 0
    %1071 = vmatprep.subr.bf16.mxu0 0
    %1072 = vmatpush1.bf16.msra.mxu0 0
    %1073 = vmatprep.subr.bf16.mxu0 0
    %1074 = vmatpush1.bf16.msra.mxu0 0
    %1075 = vmatprep.subr.bf16.mxu0 0
    %1076 = vmatpush1.bf16.msra.mxu0 0
    %1077 = vmatprep.subr.bf16.mxu0 0
    %1078 = vmatpush1.bf16.msra.mxu0 0
    %1079 = vmatprep.subr.bf16.mxu0 0
    %1080 = vmatpush1.bf16.msra.mxu0 0
    %1081 = vmatprep.subr.bf16.mxu0 0
    %1082 = vmatpush1.bf16.msra.mxu0 0
    %1083 = vmatprep.subr.bf16.mxu0 0
    %1084 = vmatpush1.bf16.msra.mxu0 0
    %1085 = vmatprep.subr.bf16.mxu0 0
    %1086 = vmatpush1.bf16.msra.mxu0 0
    %1087 = vmatprep.subr.bf16.mxu0 0
    %1088 = vmatpush1.bf16.msra.mxu0 0
    %1089 = vmatprep.subr.bf16.mxu0 0
    %1090 = vmatpush1.bf16.msra.mxu0 0
    %1091 = vmatprep.mubr.bf16.mxu0 0
    %1092 = vmatmul.mubr.bf16.gmra.mrb[0].mxu0 %v1057
    %v1093 = vpop.f32.mrb[0].mxu0
    %v1094 = vadd.f32 %v177, %v1093
    %v1095 = vpop.f32.mrb[0].mxu0
    %v1096 = vpop.f32.mrb[0].mxu0
    %v1097 = vpop.f32.mrb[0].mxu0
    %1098 = vdwg.mxu0
    %v1099 = vpack.c.bf16 %v921, %v921
    %1101 = vrot.lane.b32.xlu0 %v1099, 64
    %v1102 = vpop.permute.xlu0 %1101
    %v1104 = vsel %vm194, %v1102, 0
    %1106 = vmatprep.subr.bf16.mxu0 0
    %1107 = vmatpush1.bf16.msra.mxu0 %v354
    %1108 = vmatprep.subr.bf16.mxu0 0
    %1109 = vmatpush1.bf16.msra.mxu0 %v355
    %1110 = vmatprep.subr.bf16.mxu0 0
    %1111 = vmatpush1.bf16.msra.mxu0 0
    %1112 = vmatprep.subr.bf16.mxu0 0
    %1113 = vmatpush1.bf16.msra.mxu0 0
    %1114 = vmatprep.subr.bf16.mxu0 0
    %1115 = vmatpush1.bf16.msra.mxu0 0
    %1116 = vmatprep.subr.bf16.mxu0 0
    %1117 = vmatpush1.bf16.msra.mxu0 0
    %1118 = vmatprep.subr.bf16.mxu0 0
    %1119 = vmatpush1.bf16.msra.mxu0 0
    %1120 = vmatprep.subr.bf16.mxu0 0
    %1121 = vmatpush1.bf16.msra.mxu0 0
    %1122 = vmatprep.subr.bf16.mxu0 0
    %1123 = vmatpush1.bf16.msra.mxu0 0
    %1124 = vmatprep.subr.bf16.mxu0 0
    %1125 = vmatpush1.bf16.msra.mxu0 0
    %1126 = vmatprep.subr.bf16.mxu0 0
    %1127 = vmatpush1.bf16.msra.mxu0 0
    %1128 = vmatprep.subr.bf16.mxu0 0
    %1129 = vmatpush1.bf16.msra.mxu0 0
    %1130 = vmatprep.subr.bf16.mxu0 0
    %1131 = vmatpush1.bf16.msra.mxu0 0
    %1132 = vmatprep.subr.bf16.mxu0 0
    %1133 = vmatpush1.bf16.msra.mxu0 0
    %1134 = vmatprep.subr.bf16.mxu0 0
    %1135 = vmatpush1.bf16.msra.mxu0 0
    %1136 = vmatprep.subr.bf16.mxu0 0
    %1137 = vmatpush1.bf16.msra.mxu0 0
    %1138 = vmatprep.mubr.bf16.mxu0 0
    %1139 = vmatmul.mubr.bf16.gmra.mrb[0].mxu0 %v1104
    %v1140 = vpop.f32.mrb[0].mxu0
    %v1141 = vadd.f32 0.0, %v1140
    %v1142 = vpop.f32.mrb[0].mxu0
    %v1143 = vpop.f32.mrb[0].mxu0
    %v1144 = vpop.f32.mrb[0].mxu0
    %1145 = vdwg.mxu0
    %v1146 = vadd.f32 %v1094, %v1141
    %v1147 = vxor.u32 %v1146, 2147483648
    %v1148 = vmul.f32 %v1147, 1.442695
    %v1149 = vpow.pop %v1148
    %v1150 = vadd.f32 %v1149, 1.0
    %v1151 = vrcp.pop %v1150
    %v1152 = vmul.f32 1.0, %v1151
    %v1153 = vtanh.pop %v1146
    %v1154 = vsel %vm181, %v1152, %v1153
    %v1155 = vmul.f32 %v1154, %v915
    %1157 = vrot.lane.b32.xlu0 %v1154, 32
    %v1158 = vpop.permute.xlu0 %1157
    %v1160 = vmul.f32 %v1154, %v1158
    %1162 = vrot.lane.b32.xlu0 %v1160, 32
    %v1163 = vpop.permute.xlu0 %1162
    %v1165 = vadd.f32 %v1155, %v1163
    %v1166 = vtanh.pop %v1165
    %1168 = vrot.lane.b32.xlu0 %v1166, 32
    %v1169 = vpop.permute.xlu0 %1168
    %v1171 = vmul.f32 %v1154, %v1169
    %v1174 = vunpack.c.l.s4 1966171168
    %v1175 = vunpack.c.0.s8 %v1174
    %v1176 = vlaneseq
    %v1177 = vshrl.u32 %v1176, 7
    %v1178 = vsub.s32 %v1175, %v1177
    %v1179 = vrot.slane %v1171, %v1178
    %v1180 = vcombine.high %v1179, %v1179
    %v1182 = vunpack.c.l.s4 1966171168
    %v1183 = vunpack.c.0.s8 %v1182
    %v1184 = vlaneseq
    %v1185 = vshrl.u32 %v1184, 7
    %v1186 = vsub.s32 %v1183, %v1185
    %v1187 = vrot.slane %v1179, %v1186
    %v1189 = vunpack.c.l.s4 1966171168
    %v1190 = vunpack.c.0.s8 %v1189
    %v1191 = vlaneseq
    %v1192 = vshrl.u32 %v1191, 7
    %v1193 = vsub.s32 %v1190, %v1192
    %v1194 = vrot.slane %v1180, %v1193
    %v1195 = vlaneseq
    %v1196 = vshrl.u32 %v1195, 7
    %v1197 = vsub.s32 0, %v1196
    %v1198 = vrot.slane %v1187, %v1197
    %v1199 = vlaneseq
    %v1200 = vshrl.u32 %v1199, 7
    %v1201 = vsub.s32 0, %v1200
    %v1202 = vrot.slane %v1194, %v1201
    %1203 = vrot.lane.b32.xlu0 %v1198, 64
    %v1204 = vpop.permute.xlu0 %1203
    %1205 = vrot.lane.b32.xlu0 %v1202, 64
    %v1206 = vpop.permute.xlu0 %1205
    %1209 = vst.msk [vmem:[#allocation2 + $0x3] sm:$0x1] %vm461, %v1204
    %1210 = vst.msk [vmem:[#allocation2 + $0xb] sm:$0x1] %vm461, %v1206
    %1211 = vmatprep.subr.bf16.mxu0 0
    %1212 = vmatpush1.bf16.msra.mxu0 %v190
    %1213 = vmatprep.subr.bf16.mxu0 0
    %1214 = vmatpush1.bf16.msra.mxu0 %v191
    %1215 = vmatprep.subr.bf16.mxu0 0
    %1216 = vmatpush1.bf16.msra.mxu0 0
    %1217 = vmatprep.subr.bf16.mxu0 0
    %1218 = vmatpush1.bf16.msra.mxu0 0
    %1219 = vmatprep.subr.bf16.mxu0 0
    %1220 = vmatpush1.bf16.msra.mxu0 0
    %1221 = vmatprep.subr.bf16.mxu0 0
    %1222 = vmatpush1.bf16.msra.mxu0 0
    %1223 = vmatprep.subr.bf16.mxu0 0
    %1224 = vmatpush1.bf16.msra.mxu0 0
    %1225 = vmatprep.subr.bf16.mxu0 0
    %1226 = vmatpush1.bf16.msra.mxu0 0
    %1227 = vmatprep.subr.bf16.mxu0 0
    %1228 = vmatpush1.bf16.msra.mxu0 0
    %1229 = vmatprep.subr.bf16.mxu0 0
    %1230 = vmatpush1.bf16.msra.mxu0 0
    %1231 = vmatprep.subr.bf16.mxu0 0
    %1232 = vmatpush1.bf16.msra.mxu0 0
    %1233 = vmatprep.subr.bf16.mxu0 0
    %1234 = vmatpush1.bf16.msra.mxu0 0
    %1235 = vmatprep.subr.bf16.mxu0 0
    %1236 = vmatpush1.bf16.msra.mxu0 0
    %1237 = vmatprep.subr.bf16.mxu0 0
    %1238 = vmatpush1.bf16.msra.mxu0 0
    %1239 = vmatprep.subr.bf16.mxu0 0
    %1240 = vmatpush1.bf16.msra.mxu0 0
    %1241 = vmatprep.subr.bf16.mxu0 0
    %1242 = vmatpush1.bf16.msra.mxu0 0
    %1243 = vmatprep.mubr.bf16.mxu0 0
    %1244 = vmatmul.mubr.bf16.gmra.mrb[0].mxu0 %v1057
    %v1245 = vpop.f32.mrb[0].mxu0
    %v1246 = vadd.f32 0.0, %v1245
    %v1247 = vpop.f32.mrb[0].mxu0
    %v1248 = vpop.f32.mrb[0].mxu0
    %v1249 = vpop.f32.mrb[0].mxu0
    %1250 = vdwg.mxu0
    %v1252 = vrot.slane %v1246, 4
    %v1253 = vrot.slane %v1246, 5
    %v1256 = vadd.f32 %v154, %v1252
    %v1257 = vadd.f32 %v157, %v1253
    %v1258 = vxor.u32 %v1256, 2147483648
    %v1259 = vxor.u32 %v1257, 2147483648
    %v1260 = vmul.f32 %v1258, 1.442695
    %v1261 = vpow.pop %v1260
    %v1262 = vmul.f32 %v1259, 1.442695
    %v1263 = vpow.pop %v1262
    %v1264 = vadd.f32 %v1261, 1.0
    %v1265 = vadd.f32 %v1263, 1.0
    %v1266 = vrcp.pop %v1264
    %v1267 = vmul.f32 1.0, %v1266
    %v1268 = vrcp.pop %v1265
    %v1269 = vmul.f32 1.0, %v1268
    %v1270 = vtanh.pop %v1256
    %v1271 = vtanh.pop %v1257
    %v1274 = vrot.slane %v1267, 4
    %v1275 = vrot.slane %v1269, 3
    %v1276 = vsel %vm261, %v1275, %v1274
    %v1280 = vrot.slane %v1270, 4
    %v1281 = vrot.slane %v1271, 3
    %v1282 = vsel %vm261, %v1281, %v1280
    %v1284 = vsel %vm181, %v1276, %v1282
    %v1285 = vmul.f32 %v1284, %v1045
    %1287 = vrot.lane.b32.xlu0 %v1284, 32
    %v1288 = vpop.permute.xlu0 %1287
    %v1290 = vmul.f32 %v1284, %v1288
    %1292 = vrot.lane.b32.xlu0 %v1290, 32
    %v1293 = vpop.permute.xlu0 %1292
    %v1295 = vadd.f32 %v1285, %v1293
    %v1296 = vtanh.pop %v1295
    %1298 = vrot.lane.b32.xlu0 %v1296, 32
    %v1299 = vpop.permute.xlu0 %1298
    %v1301 = vmul.f32 %v1284, %v1299
    %v1302 = vpack.c.bf16 %v1301, %v1301
    %1304 = vrot.lane.b32.xlu0 %v1302, 64
    %v1305 = vpop.permute.xlu0 %1304
    %v1307 = vsel %vm194, %v1305, 0
    %1309 = vmatprep.subr.bf16.mxu0 0
    %1310 = vmatpush1.bf16.msra.mxu0 %v299
    %1311 = vmatprep.subr.bf16.mxu0 0
    %1312 = vmatpush1.bf16.msra.mxu0 %v300
    %1313 = vmatprep.subr.bf16.mxu0 0
    %1314 = vmatpush1.bf16.msra.mxu0 0
    %1315 = vmatprep.subr.bf16.mxu0 0
    %1316 = vmatpush1.bf16.msra.mxu0 0
    %1317 = vmatprep.subr.bf16.mxu0 0
    %1318 = vmatpush1.bf16.msra.mxu0 0
    %1319 = vmatprep.subr.bf16.mxu0 0
    %1320 = vmatpush1.bf16.msra.mxu0 0
    %1321 = vmatprep.subr.bf16.mxu0 0
    %1322 = vmatpush1.bf16.msra.mxu0 0
    %1323 = vmatprep.subr.bf16.mxu0 0
    %1324 = vmatpush1.bf16.msra.mxu0 0
    %1325 = vmatprep.subr.bf16.mxu0 0
    %1326 = vmatpush1.bf16.msra.mxu0 0
    %1327 = vmatprep.subr.bf16.mxu0 0
    %1328 = vmatpush1.bf16.msra.mxu0 0
    %1329 = vmatprep.subr.bf16.mxu0 0
    %1330 = vmatpush1.bf16.msra.mxu0 0
    %1331 = vmatprep.subr.bf16.mxu0 0
    %1332 = vmatpush1.bf16.msra.mxu0 0
    %1333 = vmatprep.subr.bf16.mxu0 0
    %1334 = vmatpush1.bf16.msra.mxu0 0
    %1335 = vmatprep.subr.bf16.mxu0 0
    %1336 = vmatpush1.bf16.msra.mxu0 0
    %1337 = vmatprep.subr.bf16.mxu0 0
    %1338 = vmatpush1.bf16.msra.mxu0 0
    %1339 = vmatprep.subr.bf16.mxu0 0
    %1340 = vmatpush1.bf16.msra.mxu0 0
    %1341 = vmatprep.mubr.bf16.mxu0 0
    %1342 = vmatmul.mubr.bf16.gmra.mrb[0].mxu0 %v1307
    %v1343 = vpop.f32.mrb[0].mxu0
    %v1344 = vadd.f32 %v177, %v1343
    %v1345 = vpop.f32.mrb[0].mxu0
    %v1346 = vpop.f32.mrb[0].mxu0
    %v1347 = vpop.f32.mrb[0].mxu0
    %1348 = vdwg.mxu0
    %v1349 = vpack.c.bf16 %v1171, %v1171
    %1351 = vrot.lane.b32.xlu0 %v1349, 64
    %v1352 = vpop.permute.xlu0 %1351
    %v1354 = vsel %vm194, %v1352, 0
    %1356 = vmatprep.subr.bf16.mxu0 0
    %1357 = vmatpush1.bf16.msra.mxu0 %v354
    %1358 = vmatprep.subr.bf16.mxu0 0
    %1359 = vmatpush1.bf16.msra.mxu0 %v355
    %1360 = vmatprep.subr.bf16.mxu0 0
    %1361 = vmatpush1.bf16.msra.mxu0 0
    %1362 = vmatprep.subr.bf16.mxu0 0
    %1363 = vmatpush1.bf16.msra.mxu0 0
    %1364 = vmatprep.subr.bf16.mxu0 0
    %1365 = vmatpush1.bf16.msra.mxu0 0
    %1366 = vmatprep.subr.bf16.mxu0 0
    %1367 = vmatpush1.bf16.msra.mxu0 0
    %1368 = vmatprep.subr.bf16.mxu0 0
    %1369 = vmatpush1.bf16.msra.mxu0 0
    %1370 = vmatprep.subr.bf16.mxu0 0
    %1371 = vmatpush1.bf16.msra.mxu0 0
    %1372 = vmatprep.subr.bf16.mxu0 0
    %1373 = vmatpush1.bf16.msra.mxu0 0
    %1374 = vmatprep.subr.bf16.mxu0 0
    %1375 = vmatpush1.bf16.msra.mxu0 0
    %1376 = vmatprep.subr.bf16.mxu0 0
    %1377 = vmatpush1.bf16.msra.mxu0 0
    %1378 = vmatprep.subr.bf16.mxu0 0
    %1379 = vmatpush1.bf16.msra.mxu0 0
    %1380 = vmatprep.subr.bf16.mxu0 0
    %1381 = vmatpush1.bf16.msra.mxu0 0
    %1382 = vmatprep.subr.bf16.mxu0 0
    %1383 = vmatpush1.bf16.msra.mxu0 0
    %1384 = vmatprep.subr.bf16.mxu0 0
    %1385 = vmatpush1.bf16.msra.mxu0 0
    %1386 = vmatprep.subr.bf16.mxu0 0
    %1387 = vmatpush1.bf16.msra.mxu0 0
    %1388 = vmatprep.mubr.bf16.mxu0 0
    %1389 = vmatmul.mubr.bf16.gmra.mrb[0].mxu0 %v1354
    %v1390 = vpop.f32.mrb[0].mxu0
    %v1391 = vadd.f32 0.0, %v1390
    %v1392 = vpop.f32.mrb[0].mxu0
    %v1393 = vpop.f32.mrb[0].mxu0
    %v1394 = vpop.f32.mrb[0].mxu0
    %1395 = vdwg.mxu0
    %v1396 = vadd.f32 %v1344, %v1391
    %v1397 = vxor.u32 %v1396, 2147483648
    %v1398 = vmul.f32 %v1397, 1.442695
    %v1399 = vpow.pop %v1398
    %v1400 = vadd.f32 %v1399, 1.0
    %v1401 = vrcp.pop %v1400
    %v1402 = vmul.f32 1.0, %v1401
    %v1403 = vtanh.pop %v1396
    %v1404 = vsel %vm181, %v1402, %v1403
    %v1405 = vmul.f32 %v1404, %v1165
    %1407 = vrot.lane.b32.xlu0 %v1404, 32
    %v1408 = vpop.permute.xlu0 %1407
    %v1410 = vmul.f32 %v1404, %v1408
    %1412 = vrot.lane.b32.xlu0 %v1410, 32
    %v1413 = vpop.permute.xlu0 %1412
    %v1415 = vadd.f32 %v1405, %v1413
    %v1416 = vtanh.pop %v1415
    %1418 = vrot.lane.b32.xlu0 %v1416, 32
    %v1419 = vpop.permute.xlu0 %1418
    %v1421 = vmul.f32 %v1404, %v1419
    %v1424 = vunpack.c.l.s4 1966171168
    %v1425 = vunpack.c.0.s8 %v1424
    %v1426 = vlaneseq
    %v1427 = vshrl.u32 %v1426, 7
    %v1428 = vsub.s32 %v1425, %v1427
    %v1429 = vrot.slane %v1421, %v1428
    %v1430 = vcombine.high %v1429, %v1429
    %v1432 = vunpack.c.l.s4 1966171168
    %v1433 = vunpack.c.0.s8 %v1432
    %v1434 = vlaneseq
    %v1435 = vshrl.u32 %v1434, 7
    %v1436 = vsub.s32 %v1433, %v1435
    %v1437 = vrot.slane %v1429, %v1436
    %v1439 = vunpack.c.l.s4 1966171168
    %v1440 = vunpack.c.0.s8 %v1439
    %v1441 = vlaneseq
    %v1442 = vshrl.u32 %v1441, 7
    %v1443 = vsub.s32 %v1440, %v1442
    %v1444 = vrot.slane %v1430, %v1443
    %v1445 = vlaneseq
    %v1446 = vshrl.u32 %v1445, 7
    %v1447 = vsub.s32 0, %v1446
    %v1448 = vrot.slane %v1437, %v1447
    %v1449 = vlaneseq
    %v1450 = vshrl.u32 %v1449, 7
    %v1451 = vsub.s32 0, %v1450
    %v1452 = vrot.slane %v1444, %v1451
    %1453 = vrot.lane.b32.xlu0 %v1448, 64
    %v1454 = vpop.permute.xlu0 %1453
    %1455 = vrot.lane.b32.xlu0 %v1452, 64
    %v1456 = vpop.permute.xlu0 %1455
    %1459 = vst.msk [vmem:[#allocation2 + $0x4] sm:$0x1] %vm461, %v1454
    %1460 = vst.msk [vmem:[#allocation2 + $0xc] sm:$0x1] %vm461, %v1456
    %1461 = vmatprep.subr.bf16.mxu0 0
    %1462 = vmatpush1.bf16.msra.mxu0 %v190
    %1463 = vmatprep.subr.bf16.mxu0 0
    %1464 = vmatpush1.bf16.msra.mxu0 %v191
    %1465 = vmatprep.subr.bf16.mxu0 0
    %1466 = vmatpush1.bf16.msra.mxu0 0
    %1467 = vmatprep.subr.bf16.mxu0 0
    %1468 = vmatpush1.bf16.msra.mxu0 0
    %1469 = vmatprep.subr.bf16.mxu0 0
    %1470 = vmatpush1.bf16.msra.mxu0 0
    %1471 = vmatprep.subr.bf16.mxu0 0
    %1472 = vmatpush1.bf16.msra.mxu0 0
    %1473 = vmatprep.subr.bf16.mxu0 0
    %1474 = vmatpush1.bf16.msra.mxu0 0
    %1475 = vmatprep.subr.bf16.mxu0 0
    %1476 = vmatpush1.bf16.msra.mxu0 0
    %1477 = vmatprep.subr.bf16.mxu0 0
    %1478 = vmatpush1.bf16.msra.mxu0 0
    %1479 = vmatprep.subr.bf16.mxu0 0
    %1480 = vmatpush1.bf16.msra.mxu0 0
    %1481 = vmatprep.subr.bf16.mxu0 0
    %1482 = vmatpush1.bf16.msra.mxu0 0
    %1483 = vmatprep.subr.bf16.mxu0 0
    %1484 = vmatpush1.bf16.msra.mxu0 0
    %1485 = vmatprep.subr.bf16.mxu0 0
    %1486 = vmatpush1.bf16.msra.mxu0 0
    %1487 = vmatprep.subr.bf16.mxu0 0
    %1488 = vmatpush1.bf16.msra.mxu0 0
    %1489 = vmatprep.subr.bf16.mxu0 0
    %1490 = vmatpush1.bf16.msra.mxu0 0
    %1491 = vmatprep.subr.bf16.mxu0 0
    %1492 = vmatpush1.bf16.msra.mxu0 0
    %1493 = vmatprep.mubr.bf16.mxu0 0
    %1494 = vmatmul.mubr.bf16.gmra.mrb[0].mxu0 %v1307
    %v1495 = vpop.f32.mrb[0].mxu0
    %v1496 = vadd.f32 0.0, %v1495
    %v1497 = vpop.f32.mrb[0].mxu0
    %v1498 = vpop.f32.mrb[0].mxu0
    %v1499 = vpop.f32.mrb[0].mxu0
    %1500 = vdwg.mxu0
    %v1502 = vrot.slane %v1496, 3
    %v1503 = vrot.slane %v1496, 4
    %v1506 = vadd.f32 %v154, %v1502
    %v1507 = vadd.f32 %v157, %v1503
    %v1508 = vxor.u32 %v1506, 2147483648
    %v1509 = vxor.u32 %v1507, 2147483648
    %v1510 = vmul.f32 %v1508, 1.442695
    %v1511 = vpow.pop %v1510
    %v1512 = vmul.f32 %v1509, 1.442695
    %v1513 = vpow.pop %v1512
    %v1514 = vadd.f32 %v1511, 1.0
    %v1515 = vadd.f32 %v1513, 1.0
    %v1516 = vrcp.pop %v1514
    %v1517 = vmul.f32 1.0, %v1516
    %v1518 = vrcp.pop %v1515
    %v1519 = vmul.f32 1.0, %v1518
    %v1520 = vtanh.pop %v1506
    %v1521 = vtanh.pop %v1507
    %v1524 = vrot.slane %v1517, 5
    %v1525 = vrot.slane %v1519, 4
    %v1526 = vsel %vm261, %v1525, %v1524
    %v1530 = vrot.slane %v1520, 5
    %v1531 = vrot.slane %v1521, 4
    %v1532 = vsel %vm261, %v1531, %v1530
    %v1534 = vsel %vm181, %v1526, %v1532
    %v1535 = vmul.f32 %v1534, %v1295
    %1537 = vrot.lane.b32.xlu0 %v1534, 32
    %v1538 = vpop.permute.xlu0 %1537
    %v1540 = vmul.f32 %v1534, %v1538
    %1542 = vrot.lane.b32.xlu0 %v1540, 32
    %v1543 = vpop.permute.xlu0 %1542
    %v1545 = vadd.f32 %v1535, %v1543
    %v1546 = vtanh.pop %v1545
    %1548 = vrot.lane.b32.xlu0 %v1546, 32
    %v1549 = vpop.permute.xlu0 %1548
    %v1551 = vmul.f32 %v1534, %v1549
    %v1552 = vpack.c.bf16 %v1551, %v1551
    %1554 = vrot.lane.b32.xlu0 %v1552, 64
    %v1555 = vpop.permute.xlu0 %1554
    %v1557 = vsel %vm194, %v1555, 0
    %1559 = vmatprep.subr.bf16.mxu0 0
    %1560 = vmatpush1.bf16.msra.mxu0 %v299
    %1561 = vmatprep.subr.bf16.mxu0 0
    %1562 = vmatpush1.bf16.msra.mxu0 %v300
    %1563 = vmatprep.subr.bf16.mxu0 0
    %1564 = vmatpush1.bf16.msra.mxu0 0
    %1565 = vmatprep.subr.bf16.mxu0 0
    %1566 = vmatpush1.bf16.msra.mxu0 0
    %1567 = vmatprep.subr.bf16.mxu0 0
    %1568 = vmatpush1.bf16.msra.mxu0 0
    %1569 = vmatprep.subr.bf16.mxu0 0
    %1570 = vmatpush1.bf16.msra.mxu0 0
    %1571 = vmatprep.subr.bf16.mxu0 0
    %1572 = vmatpush1.bf16.msra.mxu0 0
    %1573 = vmatprep.subr.bf16.mxu0 0
    %1574 = vmatpush1.bf16.msra.mxu0 0
    %1575 = vmatprep.subr.bf16.mxu0 0
    %1576 = vmatpush1.bf16.msra.mxu0 0
    %1577 = vmatprep.subr.bf16.mxu0 0
    %1578 = vmatpush1.bf16.msra.mxu0 0
    %1579 = vmatprep.subr.bf16.mxu0 0
    %1580 = vmatpush1.bf16.msra.mxu0 0
    %1581 = vmatprep.subr.bf16.mxu0 0
    %1582 = vmatpush1.bf16.msra.mxu0 0
    %1583 = vmatprep.subr.bf16.mxu0 0
    %1584 = vmatpush1.bf16.msra.mxu0 0
    %1585 = vmatprep.subr.bf16.mxu0 0
    %1586 = vmatpush1.bf16.msra.mxu0 0
    %1587 = vmatprep.subr.bf16.mxu0 0
    %1588 = vmatpush1.bf16.msra.mxu0 0
    %1589 = vmatprep.subr.bf16.mxu0 0
    %1590 = vmatpush1.bf16.msra.mxu0 0
    %1591 = vmatprep.mubr.bf16.mxu0 0
    %1592 = vmatmul.mubr.bf16.gmra.mrb[0].mxu0 %v1557
    %v1593 = vpop.f32.mrb[0].mxu0
    %v1594 = vadd.f32 %v177, %v1593
    %v1595 = vpop.f32.mrb[0].mxu0
    %v1596 = vpop.f32.mrb[0].mxu0
    %v1597 = vpop.f32.mrb[0].mxu0
    %1598 = vdwg.mxu0
    %v1599 = vpack.c.bf16 %v1421, %v1421
    %1601 = vrot.lane.b32.xlu0 %v1599, 64
    %v1602 = vpop.permute.xlu0 %1601
    %v1604 = vsel %vm194, %v1602, 0
    %1606 = vmatprep.subr.bf16.mxu0 0
    %1607 = vmatpush1.bf16.msra.mxu0 %v354
    %1608 = vmatprep.subr.bf16.mxu0 0
    %1609 = vmatpush1.bf16.msra.mxu0 %v355
    %1610 = vmatprep.subr.bf16.mxu0 0
    %1611 = vmatpush1.bf16.msra.mxu0 0
    %1612 = vmatprep.subr.bf16.mxu0 0
    %1613 = vmatpush1.bf16.msra.mxu0 0
    %1614 = vmatprep.subr.bf16.mxu0 0
    %1615 = vmatpush1.bf16.msra.mxu0 0
    %1616 = vmatprep.subr.bf16.mxu0 0
    %1617 = vmatpush1.bf16.msra.mxu0 0
    %1618 = vmatprep.subr.bf16.mxu0 0
    %1619 = vmatpush1.bf16.msra.mxu0 0
    %1620 = vmatprep.subr.bf16.mxu0 0
    %1621 = vmatpush1.bf16.msra.mxu0 0
    %1622 = vmatprep.subr.bf16.mxu0 0
    %1623 = vmatpush1.bf16.msra.mxu0 0
    %1624 = vmatprep.subr.bf16.mxu0 0
    %1625 = vmatpush1.bf16.msra.mxu0 0
    %1626 = vmatprep.subr.bf16.mxu0 0
    %1627 = vmatpush1.bf16.msra.mxu0 0
    %1628 = vmatprep.subr.bf16.mxu0 0
    %1629 = vmatpush1.bf16.msra.mxu0 0
    %1630 = vmatprep.subr.bf16.mxu0 0
    %1631 = vmatpush1.bf16.msra.mxu0 0
    %1632 = vmatprep.subr.bf16.mxu0 0
    %1633 = vmatpush1.bf16.msra.mxu0 0
    %1634 = vmatprep.subr.bf16.mxu0 0
    %1635 = vmatpush1.bf16.msra.mxu0 0
    %1636 = vmatprep.subr.bf16.mxu0 0
    %1637 = vmatpush1.bf16.msra.mxu0 0
    %1638 = vmatprep.mubr.bf16.mxu0 0
    %1639 = vmatmul.mubr.bf16.gmra.mrb[0].mxu0 %v1604
    %v1640 = vpop.f32.mrb[0].mxu0
    %v1641 = vadd.f32 0.0, %v1640
    %v1642 = vpop.f32.mrb[0].mxu0
    %v1643 = vpop.f32.mrb[0].mxu0
    %v1644 = vpop.f32.mrb[0].mxu0
    %1645 = vdwg.mxu0
    %v1646 = vadd.f32 %v1594, %v1641
    %v1647 = vxor.u32 %v1646, 2147483648
    %v1648 = vmul.f32 %v1647, 1.442695
    %v1649 = vpow.pop %v1648
    %v1650 = vadd.f32 %v1649, 1.0
    %v1651 = vrcp.pop %v1650
    %v1652 = vmul.f32 1.0, %v1651
    %v1653 = vtanh.pop %v1646
    %v1654 = vsel %vm181, %v1652, %v1653
    %v1655 = vmul.f32 %v1654, %v1415
    %1657 = vrot.lane.b32.xlu0 %v1654, 32
    %v1658 = vpop.permute.xlu0 %1657
    %v1660 = vmul.f32 %v1654, %v1658
    %1662 = vrot.lane.b32.xlu0 %v1660, 32
    %v1663 = vpop.permute.xlu0 %1662
    %v1665 = vadd.f32 %v1655, %v1663
    %v1666 = vtanh.pop %v1665
    %1668 = vrot.lane.b32.xlu0 %v1666, 32
    %v1669 = vpop.permute.xlu0 %1668
    %v1671 = vmul.f32 %v1654, %v1669
    %v1674 = vunpack.c.l.s4 1966171168
    %v1675 = vunpack.c.0.s8 %v1674
    %v1676 = vlaneseq
    %v1677 = vshrl.u32 %v1676, 7
    %v1678 = vsub.s32 %v1675, %v1677
    %v1679 = vrot.slane %v1671, %v1678
    %v1680 = vcombine.high %v1679, %v1679
    %v1682 = vunpack.c.l.s4 1966171168
    %v1683 = vunpack.c.0.s8 %v1682
    %v1684 = vlaneseq
    %v1685 = vshrl.u32 %v1684, 7
    %v1686 = vsub.s32 %v1683, %v1685
    %v1687 = vrot.slane %v1679, %v1686
    %v1689 = vunpack.c.l.s4 1966171168
    %v1690 = vunpack.c.0.s8 %v1689
    %v1691 = vlaneseq
    %v1692 = vshrl.u32 %v1691, 7
    %v1693 = vsub.s32 %v1690, %v1692
    %v1694 = vrot.slane %v1680, %v1693
    %v1695 = vlaneseq
    %v1696 = vshrl.u32 %v1695, 7
    %v1697 = vsub.s32 0, %v1696
    %v1698 = vrot.slane %v1687, %v1697
    %v1699 = vlaneseq
    %v1700 = vshrl.u32 %v1699, 7
    %v1701 = vsub.s32 0, %v1700
    %v1702 = vrot.slane %v1694, %v1701
    %1703 = vrot.lane.b32.xlu0 %v1698, 64
    %v1704 = vpop.permute.xlu0 %1703
    %1705 = vrot.lane.b32.xlu0 %v1702, 64
    %v1706 = vpop.permute.xlu0 %1705
    %1709 = vst.msk [vmem:[#allocation2 + $0x5] sm:$0x1] %vm461, %v1704
    %1710 = vst.msk [vmem:[#allocation2 + $0xd] sm:$0x1] %vm461, %v1706
    %1711 = vmatprep.subr.bf16.mxu0 0
    %1712 = vmatpush1.bf16.msra.mxu0 %v190
    %1713 = vmatprep.subr.bf16.mxu0 0
    %1714 = vmatpush1.bf16.msra.mxu0 %v191
    %1715 = vmatprep.subr.bf16.mxu0 0
    %1716 = vmatpush1.bf16.msra.mxu0 0
    %1717 = vmatprep.subr.bf16.mxu0 0
    %1718 = vmatpush1.bf16.msra.mxu0 0
    %1719 = vmatprep.subr.bf16.mxu0 0
    %1720 = vmatpush1.bf16.msra.mxu0 0
    %1721 = vmatprep.subr.bf16.mxu0 0
    %1722 = vmatpush1.bf16.msra.mxu0 0
    %1723 = vmatprep.subr.bf16.mxu0 0
    %1724 = vmatpush1.bf16.msra.mxu0 0
    %1725 = vmatprep.subr.bf16.mxu0 0
    %1726 = vmatpush1.bf16.msra.mxu0 0
    %1727 = vmatprep.subr.bf16.mxu0 0
    %1728 = vmatpush1.bf16.msra.mxu0 0
    %1729 = vmatprep.subr.bf16.mxu0 0
    %1730 = vmatpush1.bf16.msra.mxu0 0
    %1731 = vmatprep.subr.bf16.mxu0 0
    %1732 = vmatpush1.bf16.msra.mxu0 0
    %1733 = vmatprep.subr.bf16.mxu0 0
    %1734 = vmatpush1.bf16.msra.mxu0 0
    %1735 = vmatprep.subr.bf16.mxu0 0
    %1736 = vmatpush1.bf16.msra.mxu0 0
    %1737 = vmatprep.subr.bf16.mxu0 0
    %1738 = vmatpush1.bf16.msra.mxu0 0
    %1739 = vmatprep.subr.bf16.mxu0 0
    %1740 = vmatpush1.bf16.msra.mxu0 0
    %1741 = vmatprep.subr.bf16.mxu0 0
    %1742 = vmatpush1.bf16.msra.mxu0 0
    %1743 = vmatprep.mubr.bf16.mxu0 0
    %1744 = vmatmul.mubr.bf16.gmra.mrb[0].mxu0 %v1557
    %v1745 = vpop.f32.mrb[0].mxu0
    %v1746 = vadd.f32 0.0, %v1745
    %v1747 = vpop.f32.mrb[0].mxu0
    %v1748 = vpop.f32.mrb[0].mxu0
    %v1749 = vpop.f32.mrb[0].mxu0
    %1750 = vdwg.mxu0
    %v1752 = vrot.slane %v1746, 2
    %v1753 = vrot.slane %v1746, 3
    %v1756 = vadd.f32 %v154, %v1752
    %v1757 = vadd.f32 %v157, %v1753
    %v1758 = vxor.u32 %v1756, 2147483648
    %v1759 = vxor.u32 %v1757, 2147483648
    %v1760 = vmul.f32 %v1758, 1.442695
    %v1761 = vpow.pop %v1760
    %v1762 = vmul.f32 %v1759, 1.442695
    %v1763 = vpow.pop %v1762
    %v1764 = vadd.f32 %v1761, 1.0
    %v1765 = vadd.f32 %v1763, 1.0
    %v1766 = vrcp.pop %v1764
    %v1767 = vmul.f32 1.0, %v1766
    %v1768 = vrcp.pop %v1765
    %v1769 = vmul.f32 1.0, %v1768
    %v1770 = vtanh.pop %v1756
    %v1771 = vtanh.pop %v1757
    %v1774 = vrot.slane %v1767, 6
    %v1775 = vrot.slane %v1769, 5
    %v1776 = vsel %vm261, %v1775, %v1774
    %v1780 = vrot.slane %v1770, 6
    %v1781 = vrot.slane %v1771, 5
    %v1782 = vsel %vm261, %v1781, %v1780
    %v1784 = vsel %vm181, %v1776, %v1782
    %v1785 = vmul.f32 %v1784, %v1545
    %1787 = vrot.lane.b32.xlu0 %v1784, 32
    %v1788 = vpop.permute.xlu0 %1787
    %v1790 = vmul.f32 %v1784, %v1788
    %1792 = vrot.lane.b32.xlu0 %v1790, 32
    %v1793 = vpop.permute.xlu0 %1792
    %v1795 = vadd.f32 %v1785, %v1793
    %v1796 = vtanh.pop %v1795
    %1798 = vrot.lane.b32.xlu0 %v1796, 32
    %v1799 = vpop.permute.xlu0 %1798
    %v1801 = vmul.f32 %v1784, %v1799
    %v1802 = vpack.c.bf16 %v1801, %v1801
    %1804 = vrot.lane.b32.xlu0 %v1802, 64
    %v1805 = vpop.permute.xlu0 %1804
    %v1807 = vsel %vm194, %v1805, 0
    %1809 = vmatprep.subr.bf16.mxu0 0
    %1810 = vmatpush1.bf16.msra.mxu0 %v299
    %1811 = vmatprep.subr.bf16.mxu0 0
    %1812 = vmatpush1.bf16.msra.mxu0 %v300
    %1813 = vmatprep.subr.bf16.mxu0 0
    %1814 = vmatpush1.bf16.msra.mxu0 0
    %1815 = vmatprep.subr.bf16.mxu0 0
    %1816 = vmatpush1.bf16.msra.mxu0 0
    %1817 = vmatprep.subr.bf16.mxu0 0
    %1818 = vmatpush1.bf16.msra.mxu0 0
    %1819 = vmatprep.subr.bf16.mxu0 0
    %1820 = vmatpush1.bf16.msra.mxu0 0
    %1821 = vmatprep.subr.bf16.mxu0 0
    %1822 = vmatpush1.bf16.msra.mxu0 0
    %1823 = vmatprep.subr.bf16.mxu0 0
    %1824 = vmatpush1.bf16.msra.mxu0 0
    %1825 = vmatprep.subr.bf16.mxu0 0
    %1826 = vmatpush1.bf16.msra.mxu0 0
    %1827 = vmatprep.subr.bf16.mxu0 0
    %1828 = vmatpush1.bf16.msra.mxu0 0
    %1829 = vmatprep.subr.bf16.mxu0 0
    %1830 = vmatpush1.bf16.msra.mxu0 0
    %1831 = vmatprep.subr.bf16.mxu0 0
    %1832 = vmatpush1.bf16.msra.mxu0 0
    %1833 = vmatprep.subr.bf16.mxu0 0
    %1834 = vmatpush1.bf16.msra.mxu0 0
    %1835 = vmatprep.subr.bf16.mxu0 0
    %1836 = vmatpush1.bf16.msra.mxu0 0
    %1837 = vmatprep.subr.bf16.mxu0 0
    %1838 = vmatpush1.bf16.msra.mxu0 0
    %1839 = vmatprep.subr.bf16.mxu0 0
    %1840 = vmatpush1.bf16.msra.mxu0 0
    %1841 = vmatprep.mubr.bf16.mxu0 0
    %1842 = vmatmul.mubr.bf16.gmra.mrb[0].mxu0 %v1807
    %v1843 = vpop.f32.mrb[0].mxu0
    %v1844 = vadd.f32 %v177, %v1843
    %v1845 = vpop.f32.mrb[0].mxu0
    %v1846 = vpop.f32.mrb[0].mxu0
    %v1847 = vpop.f32.mrb[0].mxu0
    %1848 = vdwg.mxu0
    %v1849 = vpack.c.bf16 %v1671, %v1671
    %1851 = vrot.lane.b32.xlu0 %v1849, 64
    %v1852 = vpop.permute.xlu0 %1851
    %v1854 = vsel %vm194, %v1852, 0
    %1856 = vmatprep.subr.bf16.mxu0 0
    %1857 = vmatpush1.bf16.msra.mxu0 %v354
    %1858 = vmatprep.subr.bf16.mxu0 0
    %1859 = vmatpush1.bf16.msra.mxu0 %v355
    %1860 = vmatprep.subr.bf16.mxu0 0
    %1861 = vmatpush1.bf16.msra.mxu0 0
    %1862 = vmatprep.subr.bf16.mxu0 0
    %1863 = vmatpush1.bf16.msra.mxu0 0
    %1864 = vmatprep.subr.bf16.mxu0 0
    %1865 = vmatpush1.bf16.msra.mxu0 0
    %1866 = vmatprep.subr.bf16.mxu0 0
    %1867 = vmatpush1.bf16.msra.mxu0 0
    %1868 = vmatprep.subr.bf16.mxu0 0
    %1869 = vmatpush1.bf16.msra.mxu0 0
    %1870 = vmatprep.subr.bf16.mxu0 0
    %1871 = vmatpush1.bf16.msra.mxu0 0
    %1872 = vmatprep.subr.bf16.mxu0 0
    %1873 = vmatpush1.bf16.msra.mxu0 0
    %1874 = vmatprep.subr.bf16.mxu0 0
    %1875 = vmatpush1.bf16.msra.mxu0 0
    %1876 = vmatprep.subr.bf16.mxu0 0
    %1877 = vmatpush1.bf16.msra.mxu0 0
    %1878 = vmatprep.subr.bf16.mxu0 0
    %1879 = vmatpush1.bf16.msra.mxu0 0
    %1880 = vmatprep.subr.bf16.mxu0 0
    %1881 = vmatpush1.bf16.msra.mxu0 0
    %1882 = vmatprep.subr.bf16.mxu0 0
    %1883 = vmatpush1.bf16.msra.mxu0 0
    %1884 = vmatprep.subr.bf16.mxu0 0
    %1885 = vmatpush1.bf16.msra.mxu0 0
    %1886 = vmatprep.subr.bf16.mxu0 0
    %1887 = vmatpush1.bf16.msra.mxu0 0
    %1888 = vmatprep.mubr.bf16.mxu0 0
    %1889 = vmatmul.mubr.bf16.gmra.mrb[0].mxu0 %v1854
    %v1890 = vpop.f32.mrb[0].mxu0
    %v1891 = vadd.f32 0.0, %v1890
    %v1892 = vpop.f32.mrb[0].mxu0
    %v1893 = vpop.f32.mrb[0].mxu0
    %v1894 = vpop.f32.mrb[0].mxu0
    %1895 = vdwg.mxu0
    %v1896 = vadd.f32 %v1844, %v1891
    %v1897 = vxor.u32 %v1896, 2147483648
    %v1898 = vmul.f32 %v1897, 1.442695
    %v1899 = vpow.pop %v1898
    %v1900 = vadd.f32 %v1899, 1.0
    %v1901 = vrcp.pop %v1900
    %v1902 = vmul.f32 1.0, %v1901
    %v1903 = vtanh.pop %v1896
    %v1904 = vsel %vm181, %v1902, %v1903
    %v1905 = vmul.f32 %v1904, %v1665
    %1907 = vrot.lane.b32.xlu0 %v1904, 32
    %v1908 = vpop.permute.xlu0 %1907
    %v1910 = vmul.f32 %v1904, %v1908
    %1912 = vrot.lane.b32.xlu0 %v1910, 32
    %v1913 = vpop.permute.xlu0 %1912
    %v1915 = vadd.f32 %v1905, %v1913
    %v1916 = vtanh.pop %v1915
    %1918 = vrot.lane.b32.xlu0 %v1916, 32
    %v1919 = vpop.permute.xlu0 %1918
    %v1921 = vmul.f32 %v1904, %v1919
    %v1924 = vunpack.c.l.s4 1966171168
    %v1925 = vunpack.c.0.s8 %v1924
    %v1926 = vlaneseq
    %v1927 = vshrl.u32 %v1926, 7
    %v1928 = vsub.s32 %v1925, %v1927
    %v1929 = vrot.slane %v1921, %v1928
    %v1930 = vcombine.high %v1929, %v1929
    %v1932 = vunpack.c.l.s4 1966171168
    %v1933 = vunpack.c.0.s8 %v1932
    %v1934 = vlaneseq
    %v1935 = vshrl.u32 %v1934, 7
    %v1936 = vsub.s32 %v1933, %v1935
    %v1937 = vrot.slane %v1929, %v1936
    %v1939 = vunpack.c.l.s4 1966171168
    %v1940 = vunpack.c.0.s8 %v1939
    %v1941 = vlaneseq
    %v1942 = vshrl.u32 %v1941, 7
    %v1943 = vsub.s32 %v1940, %v1942
    %v1944 = vrot.slane %v1930, %v1943
    %v1945 = vlaneseq
    %v1946 = vshrl.u32 %v1945, 7
    %v1947 = vsub.s32 0, %v1946
    %v1948 = vrot.slane %v1937, %v1947
    %v1949 = vlaneseq
    %v1950 = vshrl.u32 %v1949, 7
    %v1951 = vsub.s32 0, %v1950
    %v1952 = vrot.slane %v1944, %v1951
    %1953 = vrot.lane.b32.xlu0 %v1948, 64
    %v1954 = vpop.permute.xlu0 %1953
    %1955 = vrot.lane.b32.xlu0 %v1952, 64
    %v1956 = vpop.permute.xlu0 %1955
    %1959 = vst.msk [vmem:[#allocation2 + $0x6] sm:$0x1] %vm461, %v1954
    %1960 = vst.msk [vmem:[#allocation2 + $0xe] sm:$0x1] %vm461, %v1956
    %1961 = vmatprep.subr.bf16.mxu0 0
    %1962 = vmatpush1.bf16.msra.mxu0 %v190
    %1963 = vmatprep.subr.bf16.mxu0 0
    %1964 = vmatpush1.bf16.msra.mxu0 %v191
    %1965 = vmatprep.subr.bf16.mxu0 0
    %1966 = vmatpush1.bf16.msra.mxu0 0
    %1967 = vmatprep.subr.bf16.mxu0 0
    %1968 = vmatpush1.bf16.msra.mxu0 0
    %1969 = vmatprep.subr.bf16.mxu0 0
    %1970 = vmatpush1.bf16.msra.mxu0 0
    %1971 = vmatprep.subr.bf16.mxu0 0
    %1972 = vmatpush1.bf16.msra.mxu0 0
    %1973 = vmatprep.subr.bf16.mxu0 0
    %1974 = vmatpush1.bf16.msra.mxu0 0
    %1975 = vmatprep.subr.bf16.mxu0 0
    %1976 = vmatpush1.bf16.msra.mxu0 0
    %1977 = vmatprep.subr.bf16.mxu0 0
    %1978 = vmatpush1.bf16.msra.mxu0 0
    %1979 = vmatprep.subr.bf16.mxu0 0
    %1980 = vmatpush1.bf16.msra.mxu0 0
    %1981 = vmatprep.subr.bf16.mxu0 0
    %1982 = vmatpush1.bf16.msra.mxu0 0
    %1983 = vmatprep.subr.bf16.mxu0 0
    %1984 = vmatpush1.bf16.msra.mxu0 0
    %1985 = vmatprep.subr.bf16.mxu0 0
    %1986 = vmatpush1.bf16.msra.mxu0 0
    %1987 = vmatprep.subr.bf16.mxu0 0
    %1988 = vmatpush1.bf16.msra.mxu0 0
    %1989 = vmatprep.subr.bf16.mxu0 0
    %1990 = vmatpush1.bf16.msra.mxu0 0
    %1991 = vmatprep.subr.bf16.mxu0 0
    %1992 = vmatpush1.bf16.msra.mxu0 0
    %1993 = vmatprep.mubr.bf16.mxu0 0
    %1994 = vmatmul.mubr.bf16.gmra.mrb[0].mxu0 %v1807
    %v1995 = vpop.f32.mrb[0].mxu0
    %v1996 = vadd.f32 0.0, %v1995
    %v1997 = vpop.f32.mrb[0].mxu0
    %v1998 = vpop.f32.mrb[0].mxu0
    %v1999 = vpop.f32.mrb[0].mxu0
    %2000 = vdwg.mxu0
    %v2002 = vrot.slane %v1996, 1
    %v2003 = vrot.slane %v1996, 2
    %v2006 = vadd.f32 %v154, %v2002
    %v2007 = vadd.f32 %v157, %v2003
    %v2008 = vxor.u32 %v2006, 2147483648
    %v2009 = vxor.u32 %v2007, 2147483648
    %v2010 = vmul.f32 %v2008, 1.442695
    %v2011 = vpow.pop %v2010
    %v2012 = vmul.f32 %v2009, 1.442695
    %v2013 = vpow.pop %v2012
    %v2014 = vadd.f32 %v2011, 1.0
    %v2015 = vadd.f32 %v2013, 1.0
    %v2016 = vrcp.pop %v2014
    %v2017 = vmul.f32 1.0, %v2016
    %v2018 = vrcp.pop %v2015
    %v2019 = vmul.f32 1.0, %v2018
    %v2020 = vtanh.pop %v2006
    %v2021 = vtanh.pop %v2007
    %v2024 = vrot.slane %v2017, 7
    %v2025 = vrot.slane %v2019, 6
    %v2026 = vsel %vm261, %v2025, %v2024
    %v2030 = vrot.slane %v2020, 7
    %v2031 = vrot.slane %v2021, 6
    %v2032 = vsel %vm261, %v2031, %v2030
    %v2034 = vsel %vm181, %v2026, %v2032
    %v2035 = vmul.f32 %v2034, %v1795
    %2037 = vrot.lane.b32.xlu0 %v2034, 32
    %v2038 = vpop.permute.xlu0 %2037
    %v2040 = vmul.f32 %v2034, %v2038
    %2042 = vrot.lane.b32.xlu0 %v2040, 32
    %v2043 = vpop.permute.xlu0 %2042
    %v2045 = vadd.f32 %v2035, %v2043
    %v2046 = vtanh.pop %v2045
    %2048 = vrot.lane.b32.xlu0 %v2046, 32
    %v2049 = vpop.permute.xlu0 %2048
    %v2051 = vmul.f32 %v2034, %v2049
    %v2052 = vpack.c.bf16 %v2051, %v2051
    %2054 = vrot.lane.b32.xlu0 %v2052, 64
    %v2055 = vpop.permute.xlu0 %2054
    %v2057 = vsel %vm194, %v2055, 0
    %2059 = vmatprep.subr.bf16.mxu0 0
    %2060 = vmatpush1.bf16.msra.mxu0 %v299
    %2061 = vmatprep.subr.bf16.mxu0 0
    %2062 = vmatpush1.bf16.msra.mxu0 %v300
    %2063 = vmatprep.subr.bf16.mxu0 0
    %2064 = vmatpush1.bf16.msra.mxu0 0
    %2065 = vmatprep.subr.bf16.mxu0 0
    %2066 = vmatpush1.bf16.msra.mxu0 0
    %2067 = vmatprep.subr.bf16.mxu0 0
    %2068 = vmatpush1.bf16.msra.mxu0 0
    %2069 = vmatprep.subr.bf16.mxu0 0
    %2070 = vmatpush1.bf16.msra.mxu0 0
    %2071 = vmatprep.subr.bf16.mxu0 0
    %2072 = vmatpush1.bf16.msra.mxu0 0
    %2073 = vmatprep.subr.bf16.mxu0 0
    %2074 = vmatpush1.bf16.msra.mxu0 0
    %2075 = vmatprep.subr.bf16.mxu0 0
    %2076 = vmatpush1.bf16.msra.mxu0 0
    %2077 = vmatprep.subr.bf16.mxu0 0
    %2078 = vmatpush1.bf16.msra.mxu0 0
    %2079 = vmatprep.subr.bf16.mxu0 0
    %2080 = vmatpush1.bf16.msra.mxu0 0
    %2081 = vmatprep.subr.bf16.mxu0 0
    %2082 = vmatpush1.bf16.msra.mxu0 0
    %2083 = vmatprep.subr.bf16.mxu0 0
    %2084 = vmatpush1.bf16.msra.mxu0 0
    %2085 = vmatprep.subr.bf16.mxu0 0
    %2086 = vmatpush1.bf16.msra.mxu0 0
    %2087 = vmatprep.subr.bf16.mxu0 0
    %2088 = vmatpush1.bf16.msra.mxu0 0
    %2089 = vmatprep.subr.bf16.mxu0 0
    %2090 = vmatpush1.bf16.msra.mxu0 0
    %2091 = vmatprep.mubr.bf16.mxu0 0
    %2092 = vmatmul.mubr.bf16.gmra.mrb[0].mxu0 %v2057
    %v2093 = vpop.f32.mrb[0].mxu0
    %v2094 = vadd.f32 %v177, %v2093
    %v2095 = vpop.f32.mrb[0].mxu0
    %v2096 = vpop.f32.mrb[0].mxu0
    %v2097 = vpop.f32.mrb[0].mxu0
    %2098 = vdwg.mxu0
    %v2099 = vpack.c.bf16 %v1921, %v1921
    %2101 = vrot.lane.b32.xlu0 %v2099, 64
    %v2102 = vpop.permute.xlu0 %2101
    %v2104 = vsel %vm194, %v2102, 0
    %2106 = vmatprep.subr.bf16.mxu0 0
    %2107 = vmatpush1.bf16.msra.mxu0 %v354
    %2108 = vmatprep.subr.bf16.mxu0 0
    %2109 = vmatpush1.bf16.msra.mxu0 %v355
    %2110 = vmatprep.subr.bf16.mxu0 0
    %2111 = vmatpush1.bf16.msra.mxu0 0
    %2112 = vmatprep.subr.bf16.mxu0 0
    %2113 = vmatpush1.bf16.msra.mxu0 0
    %2114 = vmatprep.subr.bf16.mxu0 0
    %2115 = vmatpush1.bf16.msra.mxu0 0
    %2116 = vmatprep.subr.bf16.mxu0 0
    %2117 = vmatpush1.bf16.msra.mxu0 0
    %2118 = vmatprep.subr.bf16.mxu0 0
    %2119 = vmatpush1.bf16.msra.mxu0 0
    %2120 = vmatprep.subr.bf16.mxu0 0
    %2121 = vmatpush1.bf16.msra.mxu0 0
    %2122 = vmatprep.subr.bf16.mxu0 0
    %2123 = vmatpush1.bf16.msra.mxu0 0
    %2124 = vmatprep.subr.bf16.mxu0 0
    %2125 = vmatpush1.bf16.msra.mxu0 0
    %2126 = vmatprep.subr.bf16.mxu0 0
    %2127 = vmatpush1.bf16.msra.mxu0 0
    %2128 = vmatprep.subr.bf16.mxu0 0
    %2129 = vmatpush1.bf16.msra.mxu0 0
    %2130 = vmatprep.subr.bf16.mxu0 0
    %2131 = vmatpush1.bf16.msra.mxu0 0
    %2132 = vmatprep.subr.bf16.mxu0 0
    %2133 = vmatpush1.bf16.msra.mxu0 0
    %2134 = vmatprep.subr.bf16.mxu0 0
    %2135 = vmatpush1.bf16.msra.mxu0 0
    %2136 = vmatprep.subr.bf16.mxu0 0
    %2137 = vmatpush1.bf16.msra.mxu0 0
    %2138 = vmatprep.mubr.bf16.mxu0 0
    %2139 = vmatmul.mubr.bf16.gmra.mrb[0].mxu0 %v2104
    %v2140 = vpop.f32.mrb[0].mxu0
    %v2141 = vadd.f32 0.0, %v2140
    %v2142 = vpop.f32.mrb[0].mxu0
    %v2143 = vpop.f32.mrb[0].mxu0
    %v2144 = vpop.f32.mrb[0].mxu0
    %2145 = vdwg.mxu0
    %v2146 = vadd.f32 %v2094, %v2141
    %v2147 = vxor.u32 %v2146, 2147483648
    %v2148 = vmul.f32 %v2147, 1.442695
    %v2149 = vpow.pop %v2148
    %v2150 = vadd.f32 %v2149, 1.0
    %v2151 = vrcp.pop %v2150
    %v2152 = vmul.f32 1.0, %v2151
    %v2153 = vtanh.pop %v2146
    %v2154 = vsel %vm181, %v2152, %v2153
    %v2155 = vmul.f32 %v2154, %v1915
    %2157 = vrot.lane.b32.xlu0 %v2154, 32
    %v2158 = vpop.permute.xlu0 %2157
    %v2160 = vmul.f32 %v2154, %v2158
    %2162 = vrot.lane.b32.xlu0 %v2160, 32
    %v2163 = vpop.permute.xlu0 %2162
    %v2165 = vadd.f32 %v2155, %v2163
    %v2166 = vtanh.pop %v2165
    %2168 = vrot.lane.b32.xlu0 %v2166, 32
    %v2169 = vpop.permute.xlu0 %2168
    %v2171 = vmul.f32 %v2154, %v2169
    %v2174 = vunpack.c.l.s4 1966171168
    %v2175 = vunpack.c.0.s8 %v2174
    %v2176 = vlaneseq
    %v2177 = vshrl.u32 %v2176, 7
    %v2178 = vsub.s32 %v2175, %v2177
    %v2179 = vrot.slane %v2171, %v2178
    %v2180 = vcombine.high %v2179, %v2179
    %v2182 = vunpack.c.l.s4 1966171168
    %v2183 = vunpack.c.0.s8 %v2182
    %v2184 = vlaneseq
    %v2185 = vshrl.u32 %v2184, 7
    %v2186 = vsub.s32 %v2183, %v2185
    %v2187 = vrot.slane %v2179, %v2186
    %v2189 = vunpack.c.l.s4 1966171168
    %v2190 = vunpack.c.0.s8 %v2189
    %v2191 = vlaneseq
    %v2192 = vshrl.u32 %v2191, 7
    %v2193 = vsub.s32 %v2190, %v2192
    %v2194 = vrot.slane %v2180, %v2193
    %v2195 = vlaneseq
    %v2196 = vshrl.u32 %v2195, 7
    %v2197 = vsub.s32 0, %v2196
    %v2198 = vrot.slane %v2187, %v2197
    %v2199 = vlaneseq
    %v2200 = vshrl.u32 %v2199, 7
    %v2201 = vsub.s32 0, %v2200
    %v2202 = vrot.slane %v2194, %v2201
    %2203 = vrot.lane.b32.xlu0 %v2198, 64
    %v2204 = vpop.permute.xlu0 %2203
    %2205 = vrot.lane.b32.xlu0 %v2202, 64
    %v2206 = vpop.permute.xlu0 %2205
    %2209 = vst.msk [vmem:[#allocation2 + $0x7] sm:$0x1] %vm461, %v2204
    %2210 = vst.msk [vmem:[#allocation2 + $0xf] sm:$0x1] %vm461, %v2206
    %v2211 = vld [vmem:[#allocation2] sm:$0xff]
    %v2212 = vld [vmem:[#allocation2 + $0x8] sm:$0xff]
    %v2213 = vpack.c.bf16 %v2212, %v2211
    %v2214 = vld [vmem:[%s7] sm:$0xf]
    %v2215 = vld [vmem:[%s7 + $0x4] sm:$0xf]
    %v2216 = vld [vmem:[%s7 + $0x8] sm:$0xf]
    %v2217 = vld [vmem:[%s7 + $0xc] sm:$0xf]
    %v2218 = vld [vmem:[#allocation11] sm:$0x1]
    %v2220 = vlaneseq
    %v2221 = vshrl.u32 %v2220, 7
    %v2222 = vsub.s32 0, %v2221
    %v2223 = vrot.slane %v2218, %v2222
    %v2229 = vunpack.c.l.b16 %v2214
    %v2230 = vunpack.c.l.b16 %v2215
    %v2231 = vunpack.c.l.b16 %v2216
    %v2232 = vunpack.c.l.b16 %v2217
    %v2233 = vpack.c.b16 %v2230, %v2229
    %v2234 = vpack.c.b16 %v2232, %v2231
    %v2238 = vsel %vm194, %v2213, 0
    %2240 = vmatprep.subr.bf16.mxu0 0
    %2241 = vmatpush1.bf16.msra.mxu0 %v2233
    %2242 = vmatprep.subr.bf16.mxu0 0
    %2243 = vmatpush1.bf16.msra.mxu0 %v2234
    %2244 = vmatprep.subr.bf16.mxu0 0
    %2245 = vmatpush1.bf16.msra.mxu0 0
    %2246 = vmatprep.subr.bf16.mxu0 0
    %2247 = vmatpush1.bf16.msra.mxu0 0
    %2248 = vmatprep.subr.bf16.mxu0 0
    %2249 = vmatpush1.bf16.msra.mxu0 0
    %2250 = vmatprep.subr.bf16.mxu0 0
    %2251 = vmatpush1.bf16.msra.mxu0 0
    %2252 = vmatprep.subr.bf16.mxu0 0
    %2253 = vmatpush1.bf16.msra.mxu0 0
    %2254 = vmatprep.subr.bf16.mxu0 0
    %2255 = vmatpush1.bf16.msra.mxu0 0
    %2256 = vmatprep.subr.bf16.mxu0 0
    %2257 = vmatpush1.bf16.msra.mxu0 0
    %2258 = vmatprep.subr.bf16.mxu0 0
    %2259 = vmatpush1.bf16.msra.mxu0 0
    %2260 = vmatprep.subr.bf16.mxu0 0
    %2261 = vmatpush1.bf16.msra.mxu0 0
    %2262 = vmatprep.subr.bf16.mxu0 0
    %2263 = vmatpush1.bf16.msra.mxu0 0
    %2264 = vmatprep.subr.bf16.mxu0 0
    %2265 = vmatpush1.bf16.msra.mxu0 0
    %2266 = vmatprep.subr.bf16.mxu0 0
    %2267 = vmatpush1.bf16.msra.mxu0 0
    %2268 = vmatprep.subr.bf16.mxu0 0
    %2269 = vmatpush1.bf16.msra.mxu0 0
    %2270 = vmatprep.subr.bf16.mxu0 0
    %2271 = vmatpush1.bf16.msra.mxu0 0
    %2272 = vmatprep.mubr.bf16.mxu0 0
    %2273 = vmatmul.mubr.bf16.gmra.mrb[0].mxu0 %v2238
    %v2274 = vpop.f32.mrb[0].mxu0
    %v2275 = vadd.f32 %v2223, %v2274
    %v2276 = vpop.f32.mrb[0].mxu0
    %v2277 = vpop.f32.mrb[0].mxu0
    %v2278 = vadd.f32 %v2223, %v2277
    %v2279 = vpop.f32.mrb[0].mxu0
    %2280 = vdwg.mxu0
    %vm2281 = vcmask 31744
    %2282 = vst.msk [vmem:[%s9] sm:$0xff] %vm2281, %v2275
    %2283 = vst.msk [vmem:[%s9 + $0x8] sm:$0xff] %vm2281, %v2278
    %2285 = vrot.lane.b32.xlu0 %v2051, 64
    %v2286 = vpop.permute.xlu0 %2285
    %vm2288 = vcmask 254976
    %2289 = vst.msk [vmem:[#allocation12] sm:$0x3] %vm2288, %v2286
    %2290 = vrot.lane.b32.xlu0 %v2171, 64
    %v2291 = vpop.permute.xlu0 %2290
    %s2293 = scalar_lea.vmem [#allocation12], 2
    %2294 = vst.msk [vmem:[%s2293] sm:$0x3] %vm2288, %v2291
    %2296 = vrot.lane.b32.xlu0 %v2045, 96
    %v2297 = vpop.permute.xlu0 %2296
    %2299 = vst.msk [vmem:[#allocation13] sm:$0x3] %vm2288, %v2297
    %2301 = vrot.lane.b32.xlu0 %v2165, 96
    %v2302 = vpop.permute.xlu0 %2301
    %s2304 = scalar_lea.vmem [#allocation13], 2
    %2305 = vst.msk [vmem:[%s2304] sm:$0x3] %vm2288, %v2302
    // Predicated region
    $region58: #{net_forward.1} parent=1 // pred_check
      _
    $region59: #{net_forward.1} parent=1 // pred_check_branch
      %2307 = sbr.rel (0) target = $region61
    $region60: #{net_forward.1} parent=1 // pred_region
      _
    $region61: #{net_forward.1} parent=1 // pred_fallthru
      _
    // Predicated region
    $region62: #{net_forward.1} parent=1 // pred_check
      _
    $region63: #{net_forward.1} parent=1 // pred_check_branch
      %2309 = sbr.rel (0) target = $region65
    $region64: #{net_forward.1} parent=1 // pred_region
      %s2311 = ssub.s32 64, 64
      %2312 = vsyncadd [#allocation5], %s2311
      %s2313 = sshll.u32 [#allocation12], 4
      %s2314 = int_to_ptr.vmem [resolvable:$true] %s2313
      %2319 = dma.vmem_to_hbm [thread:$0]  %s2314, 64, %s10, [#allocation5], 32, 32, 2
    $region65: #{net_forward.1} parent=1 // pred_fallthru
      _
    // Predicated region
    $region66: #{net_forward.1} parent=1 // pred_check
      _
    $region67: #{net_forward.1} parent=1 // pred_check_branch
      %2321 = sbr.rel (0) target = $region69
    $region68: #{net_forward.1} parent=1 // pred_region
      %s2323 = ssub.s32 64, 64
      %2324 = vsyncadd [#allocation14], %s2323
      %s2325 = sshll.u32 [#allocation13], 4
      %s2326 = int_to_ptr.vmem [resolvable:$true] %s2325
      %2331 = dma.vmem_to_hbm [thread:$0]  %s2326, 64, %s11, [#allocation14], 32, 32, 2
    $region69: #{net_forward.1} parent=1 // pred_fallthru
      _
    // Predicated region
    $region70: #{net_forward.1} parent=1 // pred_check
      _
    $region71: #{net_forward.1} parent=1 // pred_check_branch
      %2333 = sbr.rel (0) target = $region73
    $region72: #{net_forward.1} parent=1 // pred_region
      _
    $region73: #{net_forward.1} parent=1 // pred_fallthru
      _
    // Predicated region
    $region74: #{net_forward.1} parent=1 // pred_check
      _
    $region75: #{net_forward.1} parent=1 // pred_check_branch
      %2335 = sbr.rel (0) target = $region77
    $region76: #{net_forward.1} parent=1 // pred_region
      %2336 = dma.done [#allocation5], 64
    $region77: #{net_forward.1} parent=1 // pred_fallthru
      _
    // Predicated region
    $region78: #{net_forward.1} parent=1 // pred_check
      _
    $region79: #{net_forward.1} parent=1 // pred_check_branch
      %2338 = sbr.rel (0) target = $region81
    $region80: #{net_forward.1} parent=1 // pred_region
      %2339 = dma.done [#allocation14], 64
    $region81: #{net_forward.1} parent=1 // pred_fallthru
      _
    %2340 = vsyncpa [#allocation4], 1
    %2341 = vsyncpa [#allocation7], 1
    %2342 = vsyncpa [#allocation10], 1
    %2343 = vsyncpa [#allocation5], 1
    %2344 = vsyncpa [#allocation14], 1

</llo_original>
